<compile_context>
chip_gen: v5e
topology: v5e:2x2
jax: 0.10.0
libtpu: 0.0.40
codegen_flags: <defaults>
</compile_context>

<pallas_src>
import jax
import jax.numpy as jnp
from jax.experimental import pallas as pl
from jax.experimental.pallas import tpu as pltpu

_CP = pltpu.CompilerParams(
    dimension_semantics=("parallel",),       # batch-block axis -> both TCs on v7x
    vmem_limit_bytes=16 * 1024 * 1024,       # modest cap; per-step working set is tiny
)


def _batch_spec(block_shape):
    nd = len(block_shape)
    return pl.BlockSpec(block_shape, lambda g, nd=nd: (g,) + (0,) * (nd - 1))


def _const_spec(x):
    nd = x.ndim
    return pl.BlockSpec(x.shape, lambda g, nd=nd: (0,) * nd)


def _choose_bt(B, P, k):
    """Events per grid step: aim for ~1024 edge rows per step, keep >= 2 grid steps when possible."""
    target = max(1, 1024 // max(P * k, 1))
    best = 1
    for d in range(1, B + 1):
        if B % d == 0 and d <= target and (B // d) >= 2:
            best = d
    return best


def _round_up(x, m):
    return ((x + m - 1) // m) * m


# ----------------------------- Pallas kernels ------------------------------ #

def _make_edgeconv_kernel(k, apply_bn, separate_coords):
    """Fully fused EdgeConv block: kNN + gather + 3-layer MLP + mean-over-k + shortcut + mask."""

    def kernel(*refs):
        it = iter(refs)
        coords_ref = next(it) if separate_coords else None
        feat_ref = next(it)
        shift_ref = next(it)
        mask_ref = next(it)
        scale_ref = bias_ref = None
        if apply_bn:
            scale_ref = next(it)
            bias_ref = next(it)
        (w1c_ref, w1d_ref, b1_ref, w2_ref, b2_ref,
         w3_ref, b3_ref, wsc_ref, bsc_ref, out_ref) = tuple(it)

        bt, p, cin = feat_ref.shape
        n = bt * p                       # flattened (event, point) rows
        r = k * n                        # flattened (neighbor, event, point) edge rows

        mask3 = mask_ref[...]                                        # (Bt, P, 1) f32
        feat3 = feat_ref[...]                                        # (Bt, P, Cin) f32
        if apply_bn:                     # fused input-feature BN (eval affine) + mask (block 0)
            feat3 = (feat3 * scale_ref[...] + bias_ref[...]) * mask3
        coords3 = coords_ref[...] if separate_coords else feat3      # (Bt, P, Cc)

        # ---- kNN, fused: per-event pairwise scores + iterative top-(k+1) argmax (drop self) ----
        # score[b,p,q] = 2 x_p.x_q - |x_q|^2  ==  -||x_p - x_q||^2 + |x_p|^2 (per-row const:
        # identical ordering & ties as the true negative distance). Stays f32 (1e9 coord_shift).
        xs = coords3 + shift_ref[...]
        gram = jnp.einsum('bpc,bqc->bpq', xs, xs,
                          preferred_element_type=jnp.float32)         # (Bt, P, P)
        sq = jnp.sum(xs * xs, axis=-1)                                # (Bt, P)
        score = 2.0 * gram - sq[:, None, :]

        lane3 = jax.lax.broadcasted_iota(jnp.int32, (bt, p, p), 2)
        lane3_f = lane3.astype(jnp.float32)
        boff = jax.lax.broadcasted_iota(jnp.int32, (bt, p, 1), 0) * p  # event offset b*P
        cols = []
        for j in range(k + 1):                                        # k is small & static
            m = jnp.max(score, axis=-1, keepdims=True)
            sel_f = jnp.min(jnp.where(score == m, lane3_f, float(p)),
                            axis=-1, keepdims=True)                   # lowest index among ties
            sel = sel_f.astype(jnp.int32)                             # (Bt, P, 1)
            score = jnp.where(lane3 == sel, -jnp.inf, score)
            if j > 0:                                                 # j == 0 drops "self"
                cols.append((sel + boff).reshape(n, 1))
        nbr_col = jnp.concatenate(cols, axis=0)                       # (R, 1) flat nbr index

        # ---- fused neighbor gather as one bf16 selection matmul (values {-1, 0, +1}: exact) ----
        feat = feat3.reshape(n, cin)                                  # rows ordered (event, point)
        feat_bf = feat.astype(jnp.bfloat16)
        lane2 = jax.lax.broadcasted_iota(jnp.int32, (r, n), 1)
        ctr_col = jnp.tile(jax.lax.broadcasted_iota(jnp.int32, (n, 1), 0), (k, 1))   # (R, 1)
        sel_mat = ((lane2 == nbr_col).astype(jnp.float32) -
                   (lane2 == ctr_col).astype(jnp.float32)).astype(jnp.bfloat16)      # (R, N)
        diff = jnp.dot(sel_mat, feat_bf,
                       preferred_element_type=jnp.float32)            # (R, Cin) = x_nbr - x_ctr

        # ---- 3-layer 1x1-conv MLP (BN folded into weights, bf16 MXU, f32 accumulate) ----
        base = jnp.dot(feat_bf, w1c_ref[...],
                       preferred_element_type=jnp.float32)            # center half of conv1, (N, C1)
        h = (jnp.dot(diff.astype(jnp.bfloat16), w1d_ref[...],
                     preferred_element_type=jnp.float32)
             + jnp.tile(base, (k, 1)) + b1_ref[...])                  # tile == exact center repeat
        h = jnp.maximum(h, 0.0)
        h = jnp.maximum(jnp.dot(h.astype(jnp.bfloat16), w2_ref[...],
                                preferred_element_type=jnp.float32) + b2_ref[...], 0.0)
        h = jnp.maximum(jnp.dot(h.astype(jnp.bfloat16), w3_ref[...],
                                preferred_element_type=jnp.float32) + b3_ref[...], 0.0)  # (R, C3)

        # mean over the k neighbors: reshape-reduce over the leading axis (no pooling matmul)
        agg = jnp.mean(h.reshape(k, n, -1), axis=0)                   # (N, C3)

        # shortcut 1x1 conv (+ folded BN), residual add + ReLU, outer mask from _ParticleNet
        sc = jnp.dot(feat_bf, wsc_ref[...],
                     preferred_element_type=jnp.float32) + bsc_ref[...]
        out = jnp.maximum(sc + agg, 0.0) * mask3.reshape(n, 1)
        out_ref[...] = out.reshape(bt, p, -1).astype(out_ref.dtype)

    return kernel


def _make_fusion_head_kernel(n_in):
    """Fusion 1x1 conv + folded BN + ReLU + mask, masked average pool, and the FC head — fused."""

    def kernel(*refs):
        it = iter(refs)
        x_refs = [next(it) for _ in range(n_in)]
        mask_ref = next(it)
        cnt_ref = next(it)
        w_refs = [next(it) for _ in range(n_in)]
        bfu_ref = next(it)
        w1_ref = next(it); b1_ref = next(it)
        w2_ref = next(it); b2_ref = next(it)
        out_ref = next(it)

        bt, p, _ = x_refs[0].shape
        n = bt * p
        acc = None
        for xr, wr in zip(x_refs, w_refs):       # concat replaced by per-block weight slices
            t = jnp.dot(xr[...].reshape(n, -1).astype(jnp.bfloat16), wr[...],
                        preferred_element_type=jnp.float32)
            acc = t if acc is None else acc + t
        h = jnp.maximum(acc + bfu_ref[...], 0.0) * mask_ref[...].reshape(n, 1)   # (N, 128)
        # masked average pool over points (use_counts=True)
        pooled = jnp.sum(h.reshape(bt, p, -1), axis=1) / cnt_ref[...].reshape(bt, 1)  # (Bt, 128)
        # FC head: Linear + ReLU (+ Dropout == identity in eval) + Linear
        z = jnp.maximum(jnp.dot(pooled.astype(jnp.bfloat16), w1_ref[...],
                                preferred_element_type=jnp.float32) + b1_ref[...], 0.0)
        out_ref[0] = jnp.dot(z.astype(jnp.bfloat16), w2_ref[...],
                             preferred_element_type=jnp.float32) + b2_ref[...]

    return kernel


# ------------------------------- wrappers ---------------------------------- #

def edgeconv_block(blk, feat, coords, shift, mask, bn, bt):
    """One EdgeConvBlock.forward (kNN + graph feature + MLP + shortcut), masked."""
    B, P, cin = feat.shape
    k = blk['k']
    g = B // bt
    cout = blk['w3'].shape[-1]
    separate_coords = coords is not None
    apply_bn = bn is not None

    in_arrays, in_specs = [], []
    if separate_coords:
        in_arrays.append(coords)
        in_specs.append(_batch_spec((bt, P, coords.shape[-1])))
    in_arrays += [feat, shift, mask]
    in_specs += [_batch_spec((bt, P, cin)), _batch_spec((bt, P, 1)), _batch_spec((bt, P, 1))]
    if apply_bn:
        in_arrays += list(bn)
        in_specs += [_const_spec(bn[0]), _const_spec(bn[1])]
    wkeys = ('w1c', 'w1d', 'b1', 'w2', 'b2', 'w3', 'b3', 'wsc', 'bsc')
    in_arrays += [blk[kk] for kk in wkeys]
    in_specs += [_const_spec(blk[kk]) for kk in wkeys]

    return pl.pallas_call(
        _make_edgeconv_kernel(k, apply_bn, separate_coords),
        grid=(g,),
        out_shape=jax.ShapeDtypeStruct((B, P, cout), jnp.float32),
        in_specs=in_specs,
        out_specs=_batch_spec((bt, P, cout)),
        compiler_params=_CP,
    )(*in_arrays)


def fusion_fc_head(outputs, mask, counts, params, bt):
    B, P, _ = outputs[0].shape
    g = B // bt
    n = len(outputs)
    nc = params['fc_w2'].shape[-1]
    in_specs = ([_batch_spec((bt, P, x.shape[-1])) for x in outputs]
                + [_batch_spec((bt, P, 1)), _batch_spec((bt, 1, 1))]
                + [_const_spec(w) for w in params['fusion_ws']]
                + [_const_spec(params['fusion_b']),
                   _const_spec(params['fc_w1']), _const_spec(params['fc_b1']),
                   _const_spec(params['fc_w2']), _const_spec(params['fc_b2'])])
    out = pl.pallas_call(
        _make_fusion_head_kernel(n),
        grid=(g,),
        out_shape=jax.ShapeDtypeStruct((g, bt, nc), jnp.float32),
        in_specs=in_specs,
        out_specs=pl.BlockSpec((1, bt, nc), lambda i: (i, 0, 0)),
        compiler_params=_CP,
    )(*outputs, mask, counts, *params['fusion_ws'], params['fusion_b'],
      params['fc_w1'], params['fc_b1'], params['fc_w2'], params['fc_b2'])
    return out.reshape(B, nc)


def particlenet_forward(params, points, features):
    """points: (B, Cp, P), features: (B, Cf, P) — PyTorch (N, C, num_points) convention."""
    B, _, P = points.shape
    pts = jnp.transpose(points, (0, 2, 1)).astype(jnp.float32)        # (B, P, Cp)
    fts = jnp.transpose(features, (0, 2, 1)).astype(jnp.float32)      # (B, P, Cf)

    mask = (jnp.sum(jnp.abs(fts), axis=-1, keepdims=True) != 0).astype(jnp.float32)  # (B, P, 1)
    pts = pts * mask
    fts = fts * mask
    shift = (mask == 0).astype(jnp.float32) * 1e9                     # (B, P, 1)
    counts = jnp.maximum(jnp.sum(mask, axis=1, keepdims=True), 1.0)   # (B, 1, 1)

    kmax = max(blk['k'] for blk in params['edge_convs'])
    bt = _choose_bt(B, P, kmax)

    outputs = []
    cur = fts
    for i, blk in enumerate(params['edge_convs']):
        bn = (params['bn_fts_scale'], params['bn_fts_bias']) if i == 0 else None
        coords = pts if i == 0 else None          # None => reuse features as coords (no dup DMA)
        cur = edgeconv_block(blk, cur, coords, shift, mask, bn, bt)
        outputs.append(cur)

    return fusion_fc_head(outputs, mask, counts, params, bt)


# --------------------------- parameter construction ------------------------ #

def init_params(key, dim_features=4, num_classes=2,
                conv_params=((7, (32, 32, 32)), (7, (64, 64, 64))),
                fc_params=((128, 0.1),), pad_channels=128):
    """Random eval-mode parameters. All conv channels are zero-padded to `pad_channels` (exact:
    padded weights/biases are zero, so padded channels stay 0 through every ReLU/mask)."""
    keys = iter(jax.random.split(key, 64))

    def w(shape, scale=0.1):
        return (scale * jax.random.normal(next(keys), shape)).astype(jnp.float32)

    def bn(c):  # eval-mode BatchNorm folded to per-channel affine: y = x * scale + bias
        scale = (1.0 + 0.1 * jax.random.normal(next(keys), (1, c))).astype(jnp.float32)
        bias = (0.1 * jax.random.normal(next(keys), (1, c))).astype(jnp.float32)
        return scale, bias

    def pad_w(m, rows, cols):
        return jnp.zeros((rows, cols), jnp.float32).at[:m.shape[0], :m.shape[1]].set(m)

    def pad_b(b, cols):
        return jnp.zeros((1, cols), jnp.float32).at[:, :b.shape[1]].set(b)

    params = {}
    s, b = bn(dim_features)
    params['bn_fts_scale'] = s.reshape(1, 1, dim_features)
    params['bn_fts_bias'] = b.reshape(1, 1, dim_features)

    params['edge_convs'] = []
    in_feat = dim_features        # logical (unpadded) input channels of the block
    in_pad = dim_features         # padded channel count actually flowing between kernels
    for k, channels in conv_params:
        c1, c2, c3 = channels
        p1, p2, p3 = (_round_up(c, pad_channels) for c in channels)
        blk = {'k': int(k)}
        s1, b1 = bn(c1)
        blk['w1c'] = pad_w(w((in_feat, c1)) * s1, in_pad, p1).astype(jnp.bfloat16)  # center half
        blk['w1d'] = pad_w(w((in_feat, c1)) * s1, in_pad, p1).astype(jnp.bfloat16)  # (nbr - ctr) half
        blk['b1'] = pad_b(b1, p1)
        s2, b2 = bn(c2)
        blk['w2'] = pad_w(w((c1, c2)) * s2, p1, p2).astype(jnp.bfloat16)
        blk['b2'] = pad_b(b2, p2)
        s3, b3 = bn(c3)
        blk['w3'] = pad_w(w((c2, c3)) * s3, p2, p3).astype(jnp.bfloat16)
        blk['b3'] = pad_b(b3, p3)
        # shortcut 1x1 Conv1d + BN (in_feat != out_feats[-1] for both default blocks)
        # TODO(synk): identity-shortcut case (in_feat == out_feats[-1]) not hit by default config.
        ssc, bsc = bn(c3)
        blk['wsc'] = pad_w(w((in_feat, c3)) * ssc, in_pad, p3).astype(jnp.bfloat16)
        blk['bsc'] = pad_b(bsc, p3)
        params['edge_convs'].append(blk)
        in_feat = c3
        in_pad = p3

    in_chn = sum(ch[-1] for _, ch in conv_params)                     # 32 + 64 = 96
    out_chn = min(max((in_chn // 128) * 128, 128), 1024)              # -> 128
    sfu, bfu = bn(out_chn)
    fusion_w = w((in_chn, out_chn)) * sfu
    splits, off = [], 0                      # per-edge-conv weight slices (no runtime concat)
    for _, ch in conv_params:
        c3 = ch[-1]
        p3 = _round_up(c3, pad_channels)
        splits.append(pad_w(fusion_w[off:off + c3], p3, out_chn).astype(jnp.bfloat16))
        off += c3
    params['fusion_ws'] = splits
    params['fusion_b'] = bfu

    fc_hidden, _drop_rate = fc_params[0]                              # dropout == identity (eval)
    params['fc_w1'] = w((out_chn, fc_hidden)).astype(jnp.bfloat16)
    params['fc_b1'] = w((1, fc_hidden))
    params['fc_w2'] = w((fc_hidden, num_classes)).astype(jnp.bfloat16)
    params['fc_b2'] = w((1, num_classes))
    return params


# ----------------------------------- main ----------------------------------- #

if __name__ == "__main__":
    key = jax.random.PRNGKey(0)
    kp, kf, kw = jax.random.split(key, 3)

    B, P = 4, 16
    dim_points, dim_features, num_classes = 2, 4, 2

    points = jax.random.normal(kp, (B, dim_points, P), dtype=jnp.float32)
    features = jax.random.normal(kf, (B, dim_features, P), dtype=jnp.float32)
    # zero the last 3 points of every event so the mask / coord_shift / counts path is exercised
    valid = (jnp.arange(P) < P - 3).astype(jnp.float32)[None, None, :]
    features = features * valid

    params = init_params(kw, dim_features=dim_features, num_classes=num_classes)

    out = particlenet_forward(params, points, features)
    out = jax.block_until_ready(out)
    assert out.shape == (B, num_classes) and out.dtype == jnp.float32
    print("KERNEL_OK")
</pallas_src>

<mosaic_0001>
module attributes {stable_mosaic.version = 11 : i64} {
  func.func @kernel(%arg0: i32, %arg1: memref<2x16x2xf32, #tpu.memory_space<vmem>>, %arg2: memref<2x16x4xf32, #tpu.memory_space<vmem>>, %arg3: memref<2x16x1xf32, #tpu.memory_space<vmem>>, %arg4: memref<2x16x1xf32, #tpu.memory_space<vmem>>, %arg5: memref<1x1x4xf32, #tpu.memory_space<vmem>>, %arg6: memref<1x1x4xf32, #tpu.memory_space<vmem>>, %arg7: memref<4x128xbf16, #tpu.memory_space<vmem>>, %arg8: memref<4x128xbf16, #tpu.memory_space<vmem>>, %arg9: memref<1x128xf32, #tpu.memory_space<vmem>>, %arg10: memref<128x128xbf16, #tpu.memory_space<vmem>>, %arg11: memref<1x128xf32, #tpu.memory_space<vmem>>, %arg12: memref<128x128xbf16, #tpu.memory_space<vmem>>, %arg13: memref<1x128xf32, #tpu.memory_space<vmem>>, %arg14: memref<4x128xbf16, #tpu.memory_space<vmem>>, %arg15: memref<1x128xf32, #tpu.memory_space<vmem>>, %arg16: memref<2x16x128xf32, #tpu.memory_space<vmem>>) attributes {dimension_semantics = [#tpu.dimension_semantics<parallel>], iteration_bounds = array<i64: 2>, scalar_prefetch = 0 : i64, scratch_operands = 0 : i64, tpu.core_type = #tpu.core_type<tc>, window_params = [{transform_indices = @transform_0, window_bounds = array<i64: 2, 16, 2>}, {transform_indices = @transform_1, window_bounds = array<i64: 2, 16, 4>}, {transform_indices = @transform_2, window_bounds = array<i64: 2, 16, 1>}, {transform_indices = @transform_3, window_bounds = array<i64: 2, 16, 1>}, {pipeline_mode = #tpu.pipeline_mode<synchronous>, transform_indices = @transform_4, window_bounds = array<i64: 1, 1, 4>}, {pipeline_mode = #tpu.pipeline_mode<synchronous>, transform_indices = @transform_5, window_bounds = array<i64: 1, 1, 4>}, {pipeline_mode = #tpu.pipeline_mode<synchronous>, transform_indices = @transform_6, window_bounds = array<i64: 4, 128>}, {pipeline_mode = #tpu.pipeline_mode<synchronous>, transform_indices = @transform_7, window_bounds = array<i64: 4, 128>}, {pipeline_mode = #tpu.pipeline_mode<synchronous>, transform_indices = @transform_8, window_bounds = array<i64: 1, 128>}, {pipeline_mode = #tpu.pipeline_mode<synchronous>, transform_indices = @transform_9, window_bounds = array<i64: 128, 128>}, {pipeline_mode = #tpu.pipeline_mode<synchronous>, transform_indices = @transform_10, window_bounds = array<i64: 1, 128>}, {pipeline_mode = #tpu.pipeline_mode<synchronous>, transform_indices = @transform_11, window_bounds = array<i64: 128, 128>}, {pipeline_mode = #tpu.pipeline_mode<synchronous>, transform_indices = @transform_12, window_bounds = array<i64: 1, 128>}, {pipeline_mode = #tpu.pipeline_mode<synchronous>, transform_indices = @transform_13, window_bounds = array<i64: 4, 128>}, {pipeline_mode = #tpu.pipeline_mode<synchronous>, transform_indices = @transform_14, window_bounds = array<i64: 1, 128>}, {transform_indices = @transform_15, window_bounds = array<i64: 2, 16, 128>}]} {
    %c0 = arith.constant 0 : index
    %c0_0 = arith.constant 0 : index
    %c0_1 = arith.constant 0 : index
    %0 = vector.load %arg4[%c0, %c0_0, %c0_1] : memref<2x16x1xf32, #tpu.memory_space<vmem>>, vector<2x16x1xf32>
    %c0_2 = arith.constant 0 : index
    %c0_3 = arith.constant 0 : index
    %c0_4 = arith.constant 0 : index
    %1 = vector.load %arg2[%c0_2, %c0_3, %c0_4] : memref<2x16x4xf32, #tpu.memory_space<vmem>>, vector<2x16x4xf32>
    %c0_5 = arith.constant 0 : index
    %c0_6 = arith.constant 0 : index
    %c0_7 = arith.constant 0 : index
    %2 = vector.load %arg5[%c0_5, %c0_6, %c0_7] : memref<1x1x4xf32, #tpu.memory_space<vmem>>, vector<1x1x4xf32>
    %3 = vector.broadcast %2 : vector<1x1x4xf32> to vector<2x16x4xf32>
    %4 = arith.mulf %1, %3 : vector<2x16x4xf32>
    %c0_8 = arith.constant 0 : index
    %c0_9 = arith.constant 0 : index
    %c0_10 = arith.constant 0 : index
    %5 = vector.load %arg6[%c0_8, %c0_9, %c0_10] : memref<1x1x4xf32, #tpu.memory_space<vmem>>, vector<1x1x4xf32>
    %6 = vector.broadcast %5 : vector<1x1x4xf32> to vector<2x16x4xf32>
    %7 = arith.addf %4, %6 : vector<2x16x4xf32>
    %8 = vector.broadcast %0 : vector<2x16x1xf32> to vector<2x16x4xf32>
    %9 = arith.mulf %7, %8 : vector<2x16x4xf32>
    %c0_11 = arith.constant 0 : index
    %c0_12 = arith.constant 0 : index
    %c0_13 = arith.constant 0 : index
    %10 = vector.load %arg1[%c0_11, %c0_12, %c0_13] : memref<2x16x2xf32, #tpu.memory_space<vmem>>, vector<2x16x2xf32>
    %c0_14 = arith.constant 0 : index
    %c0_15 = arith.constant 0 : index
    %c0_16 = arith.constant 0 : index
    %11 = vector.load %arg3[%c0_14, %c0_15, %c0_16] : memref<2x16x1xf32, #tpu.memory_space<vmem>>, vector<2x16x1xf32>
    %12 = vector.broadcast %11 : vector<2x16x1xf32> to vector<2x16x2xf32>
    %13 = arith.addf %10, %12 : vector<2x16x2xf32>
    "tpu.trace_start"() <{level = 10 : i32, message = "bpc,bqc->bpq"}> : () -> ()
    %cst = arith.constant dense<0.000000e+00> : vector<2x16x16xf32>
    %14 = tpu.matmul %13, %13, %cst {dimension_numbers = #tpu.dot_dimension_numbers<[2], [2], [1], [1], [0, 0, 0, 1, 1, 1], [0], [0]>} : vector<2x16x2xf32>, vector<2x16x2xf32>, vector<2x16x16xf32> -> vector<2x16x16xf32>
    "tpu.trace_stop"() : () -> ()
    %15 = arith.mulf %13, %13 : vector<2x16x2xf32>
    %cst_17 = arith.constant dense<0.000000e+00> : vector<2x16xf32>
    %16 = vector.multi_reduction <add>, %15, %cst_17 [2] : vector<2x16x2xf32> to vector<2x16xf32>
    %cst_18 = arith.constant 2.000000e+00 : f32
    %17 = vector.broadcast %cst_18 : f32 to vector<2x16x16xf32>
    %18 = arith.mulf %17, %14 : vector<2x16x16xf32>
    %19 = vector.shape_cast %16 : vector<2x16xf32> to vector<2x1x16xf32>
    %20 = vector.broadcast %19 : vector<2x1x16xf32> to vector<2x16x16xf32>
    %21 = arith.subf %18, %20 : vector<2x16x16xf32>
    %22 = tpu.iota {dimensions = array<i32: 2>} : vector<2x16x16xi32>
    %23 = arith.sitofp %22 : vector<2x16x16xi32> to vector<2x16x16xf32>
    %24 = tpu.iota {dimensions = array<i32: 0>} : vector<2x16x1xi32>
    %c16_i32 = arith.constant 16 : i32
    %25 = vector.broadcast %c16_i32 : i32 to vector<2x16x1xi32>
    %26 = arith.muli %24, %25 : vector<2x16x1xi32>
    %cst_19 = arith.constant dense<0xFF800000> : vector<2x16xf32>
    %27 = vector.multi_reduction <maximumf>, %21, %cst_19 [2] : vector<2x16x16xf32> to vector<2x16xf32>
    %28 = vector.shape_cast %27 : vector<2x16xf32> to vector<2x16x1xf32>
    %29 = vector.broadcast %28 : vector<2x16x1xf32> to vector<2x16x16xf32>
    %30 = arith.cmpf oeq, %21, %29 : vector<2x16x16xf32>
    %cst_20 = arith.constant 1.600000e+01 : f32
    %31 = vector.broadcast %cst_20 : f32 to vector<2x16x16xf32>
    %32 = arith.select %30, %23, %31 : vector<2x16x16xi1>, vector<2x16x16xf32>
    %cst_21 = arith.constant dense<0x7F800000> : vector<2x16xf32>
    %33 = vector.multi_reduction <minimumf>, %32, %cst_21 [2] : vector<2x16x16xf32> to vector<2x16xf32>
    %34 = vector.shape_cast %33 : vector<2x16xf32> to vector<2x16x1xf32>
    %35 = arith.fptosi %34 : vector<2x16x1xf32> to vector<2x16x1xi32>
    %36 = vector.broadcast %35 : vector<2x16x1xi32> to vector<2x16x16xi32>
    %37 = arith.cmpi eq, %22, %36 : vector<2x16x16xi32>
    %cst_22 = arith.constant 0xFF800000 : f32
    %38 = vector.broadcast %cst_22 : f32 to vector<2x16x16xf32>
    %39 = arith.select %37, %38, %21 : vector<2x16x16xi1>, vector<2x16x16xf32>
    %cst_23 = arith.constant dense<0xFF800000> : vector<2x16xf32>
    %40 = vector.multi_reduction <maximumf>, %39, %cst_23 [2] : vector<2x16x16xf32> to vector<2x16xf32>
    %41 = vector.shape_cast %40 : vector<2x16xf32> to vector<2x16x1xf32>
    %42 = vector.broadcast %41 : vector<2x16x1xf32> to vector<2x16x16xf32>
    %43 = arith.cmpf oeq, %39, %42 : vector<2x16x16xf32>
    %cst_24 = arith.constant 1.600000e+01 : f32
    %44 = vector.broadcast %cst_24 : f32 to vector<2x16x16xf32>
    %45 = arith.select %43, %23, %44 : vector<2x16x16xi1>, vector<2x16x16xf32>
    %cst_25 = arith.constant dense<0x7F800000> : vector<2x16xf32>
    %46 = vector.multi_reduction <minimumf>, %45, %cst_25 [2] : vector<2x16x16xf32> to vector<2x16xf32>
    %47 = vector.shape_cast %46 : vector<2x16xf32> to vector<2x16x1xf32>
    %48 = arith.fptosi %47 : vector<2x16x1xf32> to vector<2x16x1xi32>
    %49 = vector.broadcast %48 : vector<2x16x1xi32> to vector<2x16x16xi32>
    %50 = arith.cmpi eq, %22, %49 : vector<2x16x16xi32>
    %cst_26 = arith.constant 0xFF800000 : f32
    %51 = vector.broadcast %cst_26 : f32 to vector<2x16x16xf32>
    %52 = arith.select %50, %51, %39 : vector<2x16x16xi1>, vector<2x16x16xf32>
    %53 = arith.addi %48, %26 : vector<2x16x1xi32>
    %54 = vector.shape_cast %53 : vector<2x16x1xi32> to vector<32x1xi32>
    %cst_27 = arith.constant dense<0xFF800000> : vector<2x16xf32>
    %55 = vector.multi_reduction <maximumf>, %52, %cst_27 [2] : vector<2x16x16xf32> to vector<2x16xf32>
    %56 = vector.shape_cast %55 : vector<2x16xf32> to vector<2x16x1xf32>
    %57 = vector.broadcast %56 : vector<2x16x1xf32> to vector<2x16x16xf32>
    %58 = arith.cmpf oeq, %52, %57 : vector<2x16x16xf32>
    %cst_28 = arith.constant 1.600000e+01 : f32
    %59 = vector.broadcast %cst_28 : f32 to vector<2x16x16xf32>
    %60 = arith.select %58, %23, %59 : vector<2x16x16xi1>, vector<2x16x16xf32>
    %cst_29 = arith.constant dense<0x7F800000> : vector<2x16xf32>
    %61 = vector.multi_reduction <minimumf>, %60, %cst_29 [2] : vector<2x16x16xf32> to vector<2x16xf32>
    %62 = vector.shape_cast %61 : vector<2x16xf32> to vector<2x16x1xf32>
    %63 = arith.fptosi %62 : vector<2x16x1xf32> to vector<2x16x1xi32>
    %64 = vector.broadcast %63 : vector<2x16x1xi32> to vector<2x16x16xi32>
    %65 = arith.cmpi eq, %22, %64 : vector<2x16x16xi32>
    %cst_30 = arith.constant 0xFF800000 : f32
    %66 = vector.broadcast %cst_30 : f32 to vector<2x16x16xf32>
    %67 = arith.select %65, %66, %52 : vector<2x16x16xi1>, vector<2x16x16xf32>
    %68 = arith.addi %63, %26 : vector<2x16x1xi32>
    %69 = vector.shape_cast %68 : vector<2x16x1xi32> to vector<32x1xi32>
    %cst_31 = arith.constant dense<0xFF800000> : vector<2x16xf32>
    %70 = vector.multi_reduction <maximumf>, %67, %cst_31 [2] : vector<2x16x16xf32> to vector<2x16xf32>
    %71 = vector.shape_cast %70 : vector<2x16xf32> to vector<2x16x1xf32>
    %72 = vector.broadcast %71 : vector<2x16x1xf32> to vector<2x16x16xf32>
    %73 = arith.cmpf oeq, %67, %72 : vector<2x16x16xf32>
    %cst_32 = arith.constant 1.600000e+01 : f32
    %74 = vector.broadcast %cst_32 : f32 to vector<2x16x16xf32>
    %75 = arith.select %73, %23, %74 : vector<2x16x16xi1>, vector<2x16x16xf32>
    %cst_33 = arith.constant dense<0x7F800000> : vector<2x16xf32>
    %76 = vector.multi_reduction <minimumf>, %75, %cst_33 [2] : vector<2x16x16xf32> to vector<2x16xf32>
    %77 = vector.shape_cast %76 : vector<2x16xf32> to vector<2x16x1xf32>
    %78 = arith.fptosi %77 : vector<2x16x1xf32> to vector<2x16x1xi32>
    %79 = vector.broadcast %78 : vector<2x16x1xi32> to vector<2x16x16xi32>
    %80 = arith.cmpi eq, %22, %79 : vector<2x16x16xi32>
    %cst_34 = arith.constant 0xFF800000 : f32
    %81 = vector.broadcast %cst_34 : f32 to vector<2x16x16xf32>
    %82 = arith.select %80, %81, %67 : vector<2x16x16xi1>, vector<2x16x16xf32>
    %83 = arith.addi %78, %26 : vector<2x16x1xi32>
    %84 = vector.shape_cast %83 : vector<2x16x1xi32> to vector<32x1xi32>
    %cst_35 = arith.constant dense<0xFF800000> : vector<2x16xf32>
    %85 = vector.multi_reduction <maximumf>, %82, %cst_35 [2] : vector<2x16x16xf32> to vector<2x16xf32>
    %86 = vector.shape_cast %85 : vector<2x16xf32> to vector<2x16x1xf32>
    %87 = vector.broadcast %86 : vector<2x16x1xf32> to vector<2x16x16xf32>
    %88 = arith.cmpf oeq, %82, %87 : vector<2x16x16xf32>
    %cst_36 = arith.constant 1.600000e+01 : f32
    %89 = vector.broadcast %cst_36 : f32 to vector<2x16x16xf32>
    %90 = arith.select %88, %23, %89 : vector<2x16x16xi1>, vector<2x16x16xf32>
    %cst_37 = arith.constant dense<0x7F800000> : vector<2x16xf32>
    %91 = vector.multi_reduction <minimumf>, %90, %cst_37 [2] : vector<2x16x16xf32> to vector<2x16xf32>
    %92 = vector.shape_cast %91 : vector<2x16xf32> to vector<2x16x1xf32>
    %93 = arith.fptosi %92 : vector<2x16x1xf32> to vector<2x16x1xi32>
    %94 = vector.broadcast %93 : vector<2x16x1xi32> to vector<2x16x16xi32>
    %95 = arith.cmpi eq, %22, %94 : vector<2x16x16xi32>
    %cst_38 = arith.constant 0xFF800000 : f32
    %96 = vector.broadcast %cst_38 : f32 to vector<2x16x16xf32>
    %97 = arith.select %95, %96, %82 : vector<2x16x16xi1>, vector<2x16x16xf32>
    %98 = arith.addi %93, %26 : vector<2x16x1xi32>
    %99 = vector.shape_cast %98 : vector<2x16x1xi32> to vector<32x1xi32>
    %cst_39 = arith.constant dense<0xFF800000> : vector<2x16xf32>
    %100 = vector.multi_reduction <maximumf>, %97, %cst_39 [2] : vector<2x16x16xf32> to vector<2x16xf32>
    %101 = vector.shape_cast %100 : vector<2x16xf32> to vector<2x16x1xf32>
    %102 = vector.broadcast %101 : vector<2x16x1xf32> to vector<2x16x16xf32>
    %103 = arith.cmpf oeq, %97, %102 : vector<2x16x16xf32>
    %cst_40 = arith.constant 1.600000e+01 : f32
    %104 = vector.broadcast %cst_40 : f32 to vector<2x16x16xf32>
    %105 = arith.select %103, %23, %104 : vector<2x16x16xi1>, vector<2x16x16xf32>
    %cst_41 = arith.constant dense<0x7F800000> : vector<2x16xf32>
    %106 = vector.multi_reduction <minimumf>, %105, %cst_41 [2] : vector<2x16x16xf32> to vector<2x16xf32>
    %107 = vector.shape_cast %106 : vector<2x16xf32> to vector<2x16x1xf32>
    %108 = arith.fptosi %107 : vector<2x16x1xf32> to vector<2x16x1xi32>
    %109 = vector.broadcast %108 : vector<2x16x1xi32> to vector<2x16x16xi32>
    %110 = arith.cmpi eq, %22, %109 : vector<2x16x16xi32>
    %cst_42 = arith.constant 0xFF800000 : f32
    %111 = vector.broadcast %cst_42 : f32 to vector<2x16x16xf32>
    %112 = arith.select %110, %111, %97 : vector<2x16x16xi1>, vector<2x16x16xf32>
    %113 = arith.addi %108, %26 : vector<2x16x1xi32>
    %114 = vector.shape_cast %113 : vector<2x16x1xi32> to vector<32x1xi32>
    %cst_43 = arith.constant dense<0xFF800000> : vector<2x16xf32>
    %115 = vector.multi_reduction <maximumf>, %112, %cst_43 [2] : vector<2x16x16xf32> to vector<2x16xf32>
    %116 = vector.shape_cast %115 : vector<2x16xf32> to vector<2x16x1xf32>
    %117 = vector.broadcast %116 : vector<2x16x1xf32> to vector<2x16x16xf32>
    %118 = arith.cmpf oeq, %112, %117 : vector<2x16x16xf32>
    %cst_44 = arith.constant 1.600000e+01 : f32
    %119 = vector.broadcast %cst_44 : f32 to vector<2x16x16xf32>
    %120 = arith.select %118, %23, %119 : vector<2x16x16xi1>, vector<2x16x16xf32>
    %cst_45 = arith.constant dense<0x7F800000> : vector<2x16xf32>
    %121 = vector.multi_reduction <minimumf>, %120, %cst_45 [2] : vector<2x16x16xf32> to vector<2x16xf32>
    %122 = vector.shape_cast %121 : vector<2x16xf32> to vector<2x16x1xf32>
    %123 = arith.fptosi %122 : vector<2x16x1xf32> to vector<2x16x1xi32>
    %124 = vector.broadcast %123 : vector<2x16x1xi32> to vector<2x16x16xi32>
    %125 = arith.cmpi eq, %22, %124 : vector<2x16x16xi32>
    %cst_46 = arith.constant 0xFF800000 : f32
    %126 = vector.broadcast %cst_46 : f32 to vector<2x16x16xf32>
    %127 = arith.select %125, %126, %112 : vector<2x16x16xi1>, vector<2x16x16xf32>
    %128 = arith.addi %123, %26 : vector<2x16x1xi32>
    %129 = vector.shape_cast %128 : vector<2x16x1xi32> to vector<32x1xi32>
    %cst_47 = arith.constant dense<0xFF800000> : vector<2x16xf32>
    %130 = vector.multi_reduction <maximumf>, %127, %cst_47 [2] : vector<2x16x16xf32> to vector<2x16xf32>
    %131 = vector.shape_cast %130 : vector<2x16xf32> to vector<2x16x1xf32>
    %132 = vector.broadcast %131 : vector<2x16x1xf32> to vector<2x16x16xf32>
    %133 = arith.cmpf oeq, %127, %132 : vector<2x16x16xf32>
    %cst_48 = arith.constant 1.600000e+01 : f32
    %134 = vector.broadcast %cst_48 : f32 to vector<2x16x16xf32>
    %135 = arith.select %133, %23, %134 : vector<2x16x16xi1>, vector<2x16x16xf32>
    %cst_49 = arith.constant dense<0x7F800000> : vector<2x16xf32>
    %136 = vector.multi_reduction <minimumf>, %135, %cst_49 [2] : vector<2x16x16xf32> to vector<2x16xf32>
    %137 = vector.shape_cast %136 : vector<2x16xf32> to vector<2x16x1xf32>
    %138 = arith.fptosi %137 : vector<2x16x1xf32> to vector<2x16x1xi32>
    %139 = arith.addi %138, %26 : vector<2x16x1xi32>
    %140 = vector.shape_cast %139 : vector<2x16x1xi32> to vector<32x1xi32>
    %141 = tpu.concatenate %54, %69, %84, %99, %114, %129, %140 in 0 : vector<32x1xi32>, vector<32x1xi32>, vector<32x1xi32>, vector<32x1xi32>, vector<32x1xi32>, vector<32x1xi32>, vector<32x1xi32> -> vector<224x1xi32>
    %142 = vector.shape_cast %9 : vector<2x16x4xf32> to vector<32x4xf32>
    %143 = arith.truncf %142 : vector<32x4xf32> to vector<32x4xbf16>
    %144 = tpu.iota {dimensions = array<i32: 1>} : vector<224x32xi32>
    %145 = tpu.iota {dimensions = array<i32: 0>} : vector<32x1xi32>
    %146 = tpu.concatenate %145, %145, %145, %145, %145, %145, %145 in 0 : vector<32x1xi32>, vector<32x1xi32>, vector<32x1xi32>, vector<32x1xi32>, vector<32x1xi32>, vector<32x1xi32>, vector<32x1xi32> -> vector<224x1xi32>
    %147 = vector.broadcast %141 : vector<224x1xi32> to vector<224x32xi32>
    %148 = arith.cmpi eq, %144, %147 : vector<224x32xi32>
    %149 = arith.extui %148 : vector<224x32xi1> to vector<224x32xi32>
    %150 = arith.sitofp %149 : vector<224x32xi32> to vector<224x32xf32>
    %151 = vector.broadcast %146 : vector<224x1xi32> to vector<224x32xi32>
    %152 = arith.cmpi eq, %144, %151 : vector<224x32xi32>
    %153 = arith.extui %152 : vector<224x32xi1> to vector<224x32xi32>
    %154 = arith.sitofp %153 : vector<224x32xi32> to vector<224x32xf32>
    %155 = arith.subf %150, %154 : vector<224x32xf32>
    %156 = arith.truncf %155 : vector<224x32xf32> to vector<224x32xbf16>
    %cst_50 = arith.constant dense<0.000000e+00> : vector<224x4xf32>
    %157 = tpu.matmul %156, %143, %cst_50 {dimension_numbers = #tpu.dot_dimension_numbers<[1], [0], [0], [1], [0, 0, 1, 1], [], []>} : vector<224x32xbf16>, vector<32x4xbf16>, vector<224x4xf32> -> vector<224x4xf32>
    %c0_51 = arith.constant 0 : index
    %c0_52 = arith.constant 0 : index
    %158 = vector.load %arg7[%c0_51, %c0_52] : memref<4x128xbf16, #tpu.memory_space<vmem>>, vector<4x128xbf16>
    %cst_53 = arith.constant dense<0.000000e+00> : vector<32x128xf32>
    %159 = tpu.matmul %143, %158, %cst_53 {dimension_numbers = #tpu.dot_dimension_numbers<[1], [0], [0], [1], [0, 0, 1, 1], [], []>} : vector<32x4xbf16>, vector<4x128xbf16>, vector<32x128xf32> -> vector<32x128xf32>
    %160 = arith.truncf %157 : vector<224x4xf32> to vector<224x4xbf16>
    %c0_54 = arith.constant 0 : index
    %c0_55 = arith.constant 0 : index
    %161 = vector.load %arg8[%c0_54, %c0_55] : memref<4x128xbf16, #tpu.memory_space<vmem>>, vector<4x128xbf16>
    %cst_56 = arith.constant dense<0.000000e+00> : vector<224x128xf32>
    %162 = tpu.matmul %160, %161, %cst_56 {dimension_numbers = #tpu.dot_dimension_numbers<[1], [0], [0], [1], [0, 0, 1, 1], [], []>} : vector<224x4xbf16>, vector<4x128xbf16>, vector<224x128xf32> -> vector<224x128xf32>
    %163 = tpu.concatenate %159, %159, %159, %159, %159, %159, %159 in 0 : vector<32x128xf32>, vector<32x128xf32>, vector<32x128xf32>, vector<32x128xf32>, vector<32x128xf32>, vector<32x128xf32>, vector<32x128xf32> -> vector<224x128xf32>
    %164 = arith.addf %162, %163 : vector<224x128xf32>
    %c0_57 = arith.constant 0 : index
    %c0_58 = arith.constant 0 : index
    %165 = vector.load %arg9[%c0_57, %c0_58] : memref<1x128xf32, #tpu.memory_space<vmem>>, vector<1x128xf32>
    %166 = vector.broadcast %165 : vector<1x128xf32> to vector<224x128xf32>
    %167 = arith.addf %164, %166 : vector<224x128xf32>
    %cst_59 = arith.constant 0.000000e+00 : f32
    %168 = vector.broadcast %cst_59 : f32 to vector<224x128xf32>
    %169 = arith.maximumf %167, %168 : vector<224x128xf32>
    %170 = arith.truncf %169 : vector<224x128xf32> to vector<224x128xbf16>
    %c0_60 = arith.constant 0 : index
    %c0_61 = arith.constant 0 : index
    %171 = vector.load %arg10[%c0_60, %c0_61] : memref<128x128xbf16, #tpu.memory_space<vmem>>, vector<128x128xbf16>
    %cst_62 = arith.constant dense<0.000000e+00> : vector<224x128xf32>
    %172 = tpu.matmul %170, %171, %cst_62 {dimension_numbers = #tpu.dot_dimension_numbers<[1], [0], [0], [1], [0, 0, 1, 1], [], []>} : vector<224x128xbf16>, vector<128x128xbf16>, vector<224x128xf32> -> vector<224x128xf32>
    %c0_63 = arith.constant 0 : index
    %c0_64 = arith.constant 0 : index
    %173 = vector.load %arg11[%c0_63, %c0_64] : memref<1x128xf32, #tpu.memory_space<vmem>>, vector<1x128xf32>
    %174 = vector.broadcast %173 : vector<1x128xf32> to vector<224x128xf32>
    %175 = arith.addf %172, %174 : vector<224x128xf32>
    %cst_65 = arith.constant 0.000000e+00 : f32
    %176 = vector.broadcast %cst_65 : f32 to vector<224x128xf32>
    %177 = arith.maximumf %175, %176 : vector<224x128xf32>
    %178 = arith.truncf %177 : vector<224x128xf32> to vector<224x128xbf16>
    %c0_66 = arith.constant 0 : index
    %c0_67 = arith.constant 0 : index
    %179 = vector.load %arg12[%c0_66, %c0_67] : memref<128x128xbf16, #tpu.memory_space<vmem>>, vector<128x128xbf16>
    %cst_68 = arith.constant dense<0.000000e+00> : vector<224x128xf32>
    %180 = tpu.matmul %178, %179, %cst_68 {dimension_numbers = #tpu.dot_dimension_numbers<[1], [0], [0], [1], [0, 0, 1, 1], [], []>} : vector<224x128xbf16>, vector<128x128xbf16>, vector<224x128xf32> -> vector<224x128xf32>
    %c0_69 = arith.constant 0 : index
    %c0_70 = arith.constant 0 : index
    %181 = vector.load %arg13[%c0_69, %c0_70] : memref<1x128xf32, #tpu.memory_space<vmem>>, vector<1x128xf32>
    %182 = vector.broadcast %181 : vector<1x128xf32> to vector<224x128xf32>
    %183 = arith.addf %180, %182 : vector<224x128xf32>
    %cst_71 = arith.constant 0.000000e+00 : f32
    %184 = vector.broadcast %cst_71 : f32 to vector<224x128xf32>
    %185 = arith.maximumf %183, %184 : vector<224x128xf32>
    %186 = vector.shape_cast %185 : vector<224x128xf32> to vector<7x32x128xf32>
    %cst_72 = arith.constant dense<0.000000e+00> : vector<32x128xf32>
    %187 = vector.multi_reduction <add>, %186, %cst_72 [0] : vector<7x32x128xf32> to vector<32x128xf32>
    %cst_73 = arith.constant 7.000000e+00 : f32
    %188 = vector.broadcast %cst_73 : f32 to vector<32x128xf32>
    %189 = arith.divf %187, %188 : vector<32x128xf32>
    %c0_74 = arith.constant 0 : index
    %c0_75 = arith.constant 0 : index
    %190 = vector.load %arg14[%c0_74, %c0_75] : memref<4x128xbf16, #tpu.memory_space<vmem>>, vector<4x128xbf16>
    %cst_76 = arith.constant dense<0.000000e+00> : vector<32x128xf32>
    %191 = tpu.matmul %143, %190, %cst_76 {dimension_numbers = #tpu.dot_dimension_numbers<[1], [0], [0], [1], [0, 0, 1, 1], [], []>} : vector<32x4xbf16>, vector<4x128xbf16>, vector<32x128xf32> -> vector<32x128xf32>
    %c0_77 = arith.constant 0 : index
    %c0_78 = arith.constant 0 : index
    %192 = vector.load %arg15[%c0_77, %c0_78] : memref<1x128xf32, #tpu.memory_space<vmem>>, vector<1x128xf32>
    %193 = vector.broadcast %192 : vector<1x128xf32> to vector<32x128xf32>
    %194 = arith.addf %191, %193 : vector<32x128xf32>
    %195 = arith.addf %194, %189 : vector<32x128xf32>
    %cst_79 = arith.constant 0.000000e+00 : f32
    %196 = vector.broadcast %cst_79 : f32 to vector<32x128xf32>
    %197 = arith.maximumf %195, %196 : vector<32x128xf32>
    %198 = vector.shape_cast %0 : vector<2x16x1xf32> to vector<32x1xf32>
    %199 = vector.broadcast %198 : vector<32x1xf32> to vector<32x128xf32>
    %200 = arith.mulf %197, %199 : vector<32x128xf32>
    %201 = vector.shape_cast %200 : vector<32x128xf32> to vector<2x16x128xf32>
    %c0_80 = arith.constant 0 : index
    %c0_81 = arith.constant 0 : index
    %c0_82 = arith.constant 0 : index
    %202 = vector.load %arg16[%c0_80, %c0_81, %c0_82] : memref<2x16x128xf32, #tpu.memory_space<vmem>>, vector<2x16x128xf32>
    tpu.vector_store %arg16[%c0_80, %c0_81, %c0_82], %201 {strides = array<i32>} : memref<2x16x128xf32, #tpu.memory_space<vmem>>, vector<2x16x128xf32>,
    return
  }
  func.func @transform_0(%arg0: i32) -> (i32, i32, i32) {
    %c0_i32 = arith.constant 0 : i32
    %c0_i32_0 = arith.constant 0 : i32
    %c0_i32_1 = arith.constant 0 : i32
    return %arg0, %c0_i32, %c0_i32_0 : i32, i32, i32
  }
  func.func @transform_1(%arg0: i32) -> (i32, i32, i32) {
    %c0_i32 = arith.constant 0 : i32
    %c0_i32_0 = arith.constant 0 : i32
    %c0_i32_1 = arith.constant 0 : i32
    return %arg0, %c0_i32, %c0_i32_0 : i32, i32, i32
  }
  func.func @transform_2(%arg0: i32) -> (i32, i32, i32) {
    %c0_i32 = arith.constant 0 : i32
    %c0_i32_0 = arith.constant 0 : i32
    %c0_i32_1 = arith.constant 0 : i32
    return %arg0, %c0_i32, %c0_i32_0 : i32, i32, i32
  }
  func.func @transform_3(%arg0: i32) -> (i32, i32, i32) {
    %c0_i32 = arith.constant 0 : i32
    %c0_i32_0 = arith.constant 0 : i32
    %c0_i32_1 = arith.constant 0 : i32
    return %arg0, %c0_i32, %c0_i32_0 : i32, i32, i32
  }
  func.func @transform_4(%arg0: i32) -> (i32, i32, i32) {
    %c0_i32 = arith.constant 0 : i32
    %c0_i32_0 = arith.constant 0 : i32
    %c0_i32_1 = arith.constant 0 : i32
    %c0_i32_2 = arith.constant 0 : i32
    return %c0_i32, %c0_i32_0, %c0_i32_1 : i32, i32, i32
  }
  func.func @transform_5(%arg0: i32) -> (i32, i32, i32) {
    %c0_i32 = arith.constant 0 : i32
    %c0_i32_0 = arith.constant 0 : i32
    %c0_i32_1 = arith.constant 0 : i32
    %c0_i32_2 = arith.constant 0 : i32
    return %c0_i32, %c0_i32_0, %c0_i32_1 : i32, i32, i32
  }
  func.func @transform_6(%arg0: i32) -> (i32, i32) {
    %c0_i32 = arith.constant 0 : i32
    %c0_i32_0 = arith.constant 0 : i32
    %c0_i32_1 = arith.constant 0 : i32
    return %c0_i32, %c0_i32_0 : i32, i32
  }
  func.func @transform_7(%arg0: i32) -> (i32, i32) {
    %c0_i32 = arith.constant 0 : i32
    %c0_i32_0 = arith.constant 0 : i32
    %c0_i32_1 = arith.constant 0 : i32
    return %c0_i32, %c0_i32_0 : i32, i32
  }
  func.func @transform_8(%arg0: i32) -> (i32, i32) {
    %c0_i32 = arith.constant 0 : i32
    %c0_i32_0 = arith.constant 0 : i32
    %c0_i32_1 = arith.constant 0 : i32
    return %c0_i32, %c0_i32_0 : i32, i32
  }
  func.func @transform_9(%arg0: i32) -> (i32, i32) {
    %c0_i32 = arith.constant 0 : i32
    %c0_i32_0 = arith.constant 0 : i32
    %c0_i32_1 = arith.constant 0 : i32
    return %c0_i32, %c0_i32_0 : i32, i32
  }
  func.func @transform_10(%arg0: i32) -> (i32, i32) {
    %c0_i32 = arith.constant 0 : i32
    %c0_i32_0 = arith.constant 0 : i32
    %c0_i32_1 = arith.constant 0 : i32
    return %c0_i32, %c0_i32_0 : i32, i32
  }
  func.func @transform_11(%arg0: i32) -> (i32, i32) {
    %c0_i32 = arith.constant 0 : i32
    %c0_i32_0 = arith.constant 0 : i32
    %c0_i32_1 = arith.constant 0 : i32
    return %c0_i32, %c0_i32_0 : i32, i32
  }
  func.func @transform_12(%arg0: i32) -> (i32, i32) {
    %c0_i32 = arith.constant 0 : i32
    %c0_i32_0 = arith.constant 0 : i32
    %c0_i32_1 = arith.constant 0 : i32
    return %c0_i32, %c0_i32_0 : i32, i32
  }
  func.func @transform_13(%arg0: i32) -> (i32, i32) {
    %c0_i32 = arith.constant 0 : i32
    %c0_i32_0 = arith.constant 0 : i32
    %c0_i32_1 = arith.constant 0 : i32
    return %c0_i32, %c0_i32_0 : i32, i32
  }
  func.func @transform_14(%arg0: i32) -> (i32, i32) {
    %c0_i32 = arith.constant 0 : i32
    %c0_i32_0 = arith.constant 0 : i32
    %c0_i32_1 = arith.constant 0 : i32
    return %c0_i32, %c0_i32_0 : i32, i32
  }
  func.func @transform_15(%arg0: i32) -> (i32, i32, i32) {
    %c0_i32 = arith.constant 0 : i32
    %c0_i32_0 = arith.constant 0 : i32
    %c0_i32_1 = arith.constant 0 : i32
    return %arg0, %c0_i32, %c0_i32_0 : i32, i32, i32
  }
}

</mosaic_0001>

<llo_original>
// kernel: tpu_custom_call.1
$region0: #{tpu_custom_call.1}
  #allocation0 [shape = 'u32[]', space=smem, size = 0x4, offset = 0x4, fixed_abs, tag = 'smem constant byte address 0x4 - core index']
  #allocation1 [shape = 'u32[72,128]{1,0:T(1,128)}', space=vmem, size = 0x9000, scoped, tag = 'internal scratch']
  %s0 = inlined_call_operand.vmem [shape: f32[4,16,2], index: 0, kind: input, shape index: {}]
  %s1 = inlined_call_operand.vmem [shape: f32[4,16,4], index: 1, kind: input, shape index: {}]
  %s2 = inlined_call_operand.vmem [shape: f32[4,16,1], index: 2, kind: input, shape index: {}]
  %s3 = inlined_call_operand.vmem [shape: f32[4,16,1], index: 3, kind: input, shape index: {}]
  %s4 = inlined_call_operand.vmem [shape: f32[1,1,4], index: 4, kind: input, shape index: {}]
  %s5 = inlined_call_operand.vmem [shape: f32[1,1,4], index: 5, kind: input, shape index: {}]
  %s6 = inlined_call_operand.vmem [shape: bf16[4,128], index: 6, kind: input, shape index: {}]
  %s7 = inlined_call_operand.vmem [shape: bf16[4,128], index: 7, kind: input, shape index: {}]
  %s8 = inlined_call_operand.vmem [shape: f32[1,128], index: 8, kind: input, shape index: {}]
  %s9 = inlined_call_operand.vmem [shape: bf16[128,128], index: 9, kind: input, shape index: {}]
  %s10 = inlined_call_operand.vmem [shape: f32[1,128], index: 10, kind: input, shape index: {}]
  %s11 = inlined_call_operand.vmem [shape: bf16[128,128], index: 11, kind: input, shape index: {}]
  %s12 = inlined_call_operand.vmem [shape: f32[1,128], index: 12, kind: input, shape index: {}]
  %s13 = inlined_call_operand.vmem [shape: bf16[4,128], index: 13, kind: input, shape index: {}]
  %s14 = inlined_call_operand.vmem [shape: f32[1,128], index: 14, kind: input, shape index: {}]
  %s15 = inlined_call_operand.hbm [shape: f32[4,16,128], index: 15, kind: output, shape index: {}]
  %s16 = sld [smem:[#allocation0]]
  $region93: #{tpu_custom_call.1} parent=0
    _
  %s18 = ssub.s32 1, %s16
  %s19 = scalar_select 0, %s18, %s16
  $region1: #{tpu_custom_call.1} parent=0
    #allocation2 [shape = 'u8[32768]{0}', space=vmem, size = 0x8000, scoped, tag = 'output window, operand 0']
    #allocation3 [shape = 's32[2]{0}', space=sflag, size = 0x8, scoped, tag = 'scoped memory for tpu_custom_call.1']
    %20 = vsyncpa [#allocation3], 0
    %s21 = scalar_lea.sflag [#allocation3], 1
    %22 = vsyncpa %s21, 0
    loop: start=0, step=1, limit=4
    $region2: #{tpu_custom_call.1} parent=1 // loop_pre_header
      _
    $region3: #{tpu_custom_call.1} parent=1 // loop_header
      %s24 = sphi 0, %s28
      %p25 = scmp.ge.s32.totalorder %s24, 4
      %s34 = sphi 0, %s36
      %s37 = sphi 0, %s34
      %s38 = sphi 0, %s37
      %s54 = sphi 0, %s38
      %s60 = sphi 0, %s62
      %s63 = sphi 0, %s60
      %s64 = sphi 0, %s63
      %s80 = sphi 0, %s64
      %s86 = sphi 0, %s88
      %s89 = sphi 0, %s86
      %s90 = sphi 0, %s89
      %s106 = sphi 0, %s90
      %s112 = sphi 0, %s114
      %s115 = sphi 0, %s112
      %s116 = sphi 0, %s115
      %s132 = sphi 0, %s116
      %s136 = sphi 0, %s136
      %s138 = sphi 0, %s136
      %s139 = sphi 0, %s138
      %s153 = sphi 0, %s139
      %s157 = sphi 0, %s157
      %s159 = sphi 0, %s157
      %s160 = sphi 0, %s159
      %s174 = sphi 0, %s160
      %s178 = sphi 0, %s178
      %s180 = sphi 0, %s178
      %s181 = sphi 0, %s180
      %s195 = sphi 0, %s181
      %s199 = sphi 0, %s199
      %s201 = sphi 0, %s199
      %s202 = sphi 0, %s201
      %s216 = sphi 0, %s202
      %s220 = sphi 0, %s220
      %s222 = sphi 0, %s220
      %s223 = sphi 0, %s222
      %s237 = sphi 0, %s223
      %s241 = sphi 0, %s241
      %s243 = sphi 0, %s241
      %s244 = sphi 0, %s243
      %s258 = sphi 0, %s244
      %s262 = sphi 0, %s262
      %s264 = sphi 0, %s262
      %s265 = sphi 0, %s264
      %s279 = sphi 0, %s265
      %s283 = sphi 0, %s283
      %s285 = sphi 0, %s283
      %s286 = sphi 0, %s285
      %s300 = sphi 0, %s286
      %s304 = sphi 0, %s304
      %s306 = sphi 0, %s304
      %s307 = sphi 0, %s306
      %s321 = sphi 0, %s307
      %s325 = sphi 0, %s325
      %s327 = sphi 0, %s325
      %s328 = sphi 0, %s327
      %s342 = sphi 0, %s328
      %s346 = sphi 0, %s346
      %s348 = sphi 0, %s346
      %s349 = sphi 0, %s348
      %s363 = sphi 0, %s349
      %s369 = sphi 0, %s371
      %s372 = sphi 0, %s369
      %s373 = sphi 0, %s372
      %s389 = sphi 0, %s373
    $region4: #{tpu_custom_call.1} parent=1 // loop_header_branch
      %27 = sbr.rel (%p25) target = $region8
    $region5: #{tpu_custom_call.1} parent=1 // loop_body
      %s29 = ssub.s32 %s24, 1
      %s30 = ssub.s32 %s24, 2
      %s31 = sadd.s32 %s24, 1
      %s32 = ssub.s32 %s24, %s31
      %p33 = scmp.eq.s32.totalorder %s32, 0
      %s35 = sadd.s32 %s34, 1
      %s36 = scalar_select %p33, %s34, %s35
      %p39 = pneg %p33
      %p40 = scmp.eq.s32.totalorder %s24, 1
      %p41 = por %p39, %p40
      %p42 = scmp.ne.s32.totalorder %s34, %s37
      %p43 = scmp.eq.s32.totalorder %s24, 0
      %p44 = por %p42, %p43
      %p45 = scmp.ne.s32.totalorder %s34, %s37
      %p46 = scmp.eq.s32.totalorder %s29, 1
      %p47 = por %p45, %p46
      %p48 = scmp.ne.s32.totalorder %s37, %s38
      %p49 = scmp.eq.s32.totalorder %s29, 0
      %p50 = por %p48, %p49
      %p51 = scmp.ne.s32.totalorder %s37, %s38
      %p52 = scmp.eq.s32.totalorder %s30, 1
      %p53 = por %p51, %p52
      %p55 = scmp.ne.s32.totalorder %s38, %s54
      %p56 = scmp.eq.s32.totalorder %s30, 0
      %p57 = por %p55, %p56
      %s58 = ssub.s32 %s24, %s31
      %p59 = scmp.eq.s32.totalorder %s58, 0
      %s61 = sadd.s32 %s60, 1
      %s62 = scalar_select %p59, %s60, %s61
      %p65 = pneg %p59
      %p66 = scmp.eq.s32.totalorder %s24, 1
      %p67 = por %p65, %p66
      %p68 = scmp.ne.s32.totalorder %s60, %s63
      %p69 = scmp.eq.s32.totalorder %s24, 0
      %p70 = por %p68, %p69
      %p71 = scmp.ne.s32.totalorder %s60, %s63
      %p72 = scmp.eq.s32.totalorder %s29, 1
      %p73 = por %p71, %p72
      %p74 = scmp.ne.s32.totalorder %s63, %s64
      %p75 = scmp.eq.s32.totalorder %s29, 0
      %p76 = por %p74, %p75
      %p77 = scmp.ne.s32.totalorder %s63, %s64
      %p78 = scmp.eq.s32.totalorder %s30, 1
      %p79 = por %p77, %p78
      %p81 = scmp.ne.s32.totalorder %s64, %s80
      %p82 = scmp.eq.s32.totalorder %s30, 0
      %p83 = por %p81, %p82
      %s84 = ssub.s32 %s24, %s31
      %p85 = scmp.eq.s32.totalorder %s84, 0
      %s87 = sadd.s32 %s86, 1
      %s88 = scalar_select %p85, %s86, %s87
      %p91 = pneg %p85
      %p92 = scmp.eq.s32.totalorder %s24, 1
      %p93 = por %p91, %p92
      %p94 = scmp.ne.s32.totalorder %s86, %s89
      %p95 = scmp.eq.s32.totalorder %s24, 0
      %p96 = por %p94, %p95
      %p97 = scmp.ne.s32.totalorder %s86, %s89
      %p98 = scmp.eq.s32.totalorder %s29, 1
      %p99 = por %p97, %p98
      %p100 = scmp.ne.s32.totalorder %s89, %s90
      %p101 = scmp.eq.s32.totalorder %s29, 0
      %p102 = por %p100, %p101
      %p103 = scmp.ne.s32.totalorder %s89, %s90
      %p104 = scmp.eq.s32.totalorder %s30, 1
      %p105 = por %p103, %p104
      %p107 = scmp.ne.s32.totalorder %s90, %s106
      %p108 = scmp.eq.s32.totalorder %s30, 0
      %p109 = por %p107, %p108
      %s110 = ssub.s32 %s24, %s31
      %p111 = scmp.eq.s32.totalorder %s110, 0
      %s113 = sadd.s32 %s112, 1
      %s114 = scalar_select %p111, %s112, %s113
      %p117 = pneg %p111
      %p118 = scmp.eq.s32.totalorder %s24, 1
      %p119 = por %p117, %p118
      %p120 = scmp.ne.s32.totalorder %s112, %s115
      %p121 = scmp.eq.s32.totalorder %s24, 0
      %p122 = por %p120, %p121
      %p123 = scmp.ne.s32.totalorder %s112, %s115
      %p124 = scmp.eq.s32.totalorder %s29, 1
      %p125 = por %p123, %p124
      %p126 = scmp.ne.s32.totalorder %s115, %s116
      %p127 = scmp.eq.s32.totalorder %s29, 0
      %p128 = por %p126, %p127
      %p129 = scmp.ne.s32.totalorder %s115, %s116
      %p130 = scmp.eq.s32.totalorder %s30, 1
      %p131 = por %p129, %p130
      %p133 = scmp.ne.s32.totalorder %s116, %s132
      %p134 = scmp.eq.s32.totalorder %s30, 0
      %p135 = por %p133, %p134
      %s137 = sadd.s32 %s136, 1
      %p140 = scmp.eq.s32.totalorder %s24, 1
      %p141 = scmp.ne.s32.totalorder %s136, %s138
      %p142 = scmp.eq.s32.totalorder %s24, 0
      %p143 = por %p141, %p142
      %p144 = scmp.ne.s32.totalorder %s136, %s138
      %p145 = scmp.eq.s32.totalorder %s29, 1
      %p146 = por %p144, %p145
      %p147 = scmp.ne.s32.totalorder %s138, %s139
      %p148 = scmp.eq.s32.totalorder %s29, 0
      %p149 = por %p147, %p148
      %p150 = scmp.ne.s32.totalorder %s138, %s139
      %p151 = scmp.eq.s32.totalorder %s30, 1
      %p152 = por %p150, %p151
      %p154 = scmp.ne.s32.totalorder %s139, %s153
      %p155 = scmp.eq.s32.totalorder %s30, 0
      %p156 = por %p154, %p155
      %s158 = sadd.s32 %s157, 1
      %p161 = scmp.eq.s32.totalorder %s24, 1
      %p162 = scmp.ne.s32.totalorder %s157, %s159
      %p163 = scmp.eq.s32.totalorder %s24, 0
      %p164 = por %p162, %p163
      %p165 = scmp.ne.s32.totalorder %s157, %s159
      %p166 = scmp.eq.s32.totalorder %s29, 1
      %p167 = por %p165, %p166
      %p168 = scmp.ne.s32.totalorder %s159, %s160
      %p169 = scmp.eq.s32.totalorder %s29, 0
      %p170 = por %p168, %p169
      %p171 = scmp.ne.s32.totalorder %s159, %s160
      %p172 = scmp.eq.s32.totalorder %s30, 1
      %p173 = por %p171, %p172
      %p175 = scmp.ne.s32.totalorder %s160, %s174
      %p176 = scmp.eq.s32.totalorder %s30, 0
      %p177 = por %p175, %p176
      %s179 = sadd.s32 %s178, 1
      %p182 = scmp.eq.s32.totalorder %s24, 1
      %p183 = scmp.ne.s32.totalorder %s178, %s180
      %p184 = scmp.eq.s32.totalorder %s24, 0
      %p185 = por %p183, %p184
      %p186 = scmp.ne.s32.totalorder %s178, %s180
      %p187 = scmp.eq.s32.totalorder %s29, 1
      %p188 = por %p186, %p187
      %p189 = scmp.ne.s32.totalorder %s180, %s181
      %p190 = scmp.eq.s32.totalorder %s29, 0
      %p191 = por %p189, %p190
      %p192 = scmp.ne.s32.totalorder %s180, %s181
      %p193 = scmp.eq.s32.totalorder %s30, 1
      %p194 = por %p192, %p193
      %p196 = scmp.ne.s32.totalorder %s181, %s195
      %p197 = scmp.eq.s32.totalorder %s30, 0
      %p198 = por %p196, %p197
      %s200 = sadd.s32 %s199, 1
      %p203 = scmp.eq.s32.totalorder %s24, 1
      %p204 = scmp.ne.s32.totalorder %s199, %s201
      %p205 = scmp.eq.s32.totalorder %s24, 0
      %p206 = por %p204, %p205
      %p207 = scmp.ne.s32.totalorder %s199, %s201
      %p208 = scmp.eq.s32.totalorder %s29, 1
      %p209 = por %p207, %p208
      %p210 = scmp.ne.s32.totalorder %s201, %s202
      %p211 = scmp.eq.s32.totalorder %s29, 0
      %p212 = por %p210, %p211
      %p213 = scmp.ne.s32.totalorder %s201, %s202
      %p214 = scmp.eq.s32.totalorder %s30, 1
      %p215 = por %p213, %p214
      %p217 = scmp.ne.s32.totalorder %s202, %s216
      %p218 = scmp.eq.s32.totalorder %s30, 0
      %p219 = por %p217, %p218
      %s221 = sadd.s32 %s220, 1
      %p224 = scmp.eq.s32.totalorder %s24, 1
      %p225 = scmp.ne.s32.totalorder %s220, %s222
      %p226 = scmp.eq.s32.totalorder %s24, 0
      %p227 = por %p225, %p226
      %p228 = scmp.ne.s32.totalorder %s220, %s222
      %p229 = scmp.eq.s32.totalorder %s29, 1
      %p230 = por %p228, %p229
      %p231 = scmp.ne.s32.totalorder %s222, %s223
      %p232 = scmp.eq.s32.totalorder %s29, 0
      %p233 = por %p231, %p232
      %p234 = scmp.ne.s32.totalorder %s222, %s223
      %p235 = scmp.eq.s32.totalorder %s30, 1
      %p236 = por %p234, %p235
      %p238 = scmp.ne.s32.totalorder %s223, %s237
      %p239 = scmp.eq.s32.totalorder %s30, 0
      %p240 = por %p238, %p239
      %s242 = sadd.s32 %s241, 1
      %p245 = scmp.eq.s32.totalorder %s24, 1
      %p246 = scmp.ne.s32.totalorder %s241, %s243
      %p247 = scmp.eq.s32.totalorder %s24, 0
      %p248 = por %p246, %p247
      %p249 = scmp.ne.s32.totalorder %s241, %s243
      %p250 = scmp.eq.s32.totalorder %s29, 1
      %p251 = por %p249, %p250
      %p252 = scmp.ne.s32.totalorder %s243, %s244
      %p253 = scmp.eq.s32.totalorder %s29, 0
      %p254 = por %p252, %p253
      %p255 = scmp.ne.s32.totalorder %s243, %s244
      %p256 = scmp.eq.s32.totalorder %s30, 1
      %p257 = por %p255, %p256
      %p259 = scmp.ne.s32.totalorder %s244, %s258
      %p260 = scmp.eq.s32.totalorder %s30, 0
      %p261 = por %p259, %p260
      %s263 = sadd.s32 %s262, 1
      %p266 = scmp.eq.s32.totalorder %s24, 1
      %p267 = scmp.ne.s32.totalorder %s262, %s264
      %p268 = scmp.eq.s32.totalorder %s24, 0
      %p269 = por %p267, %p268
      %p270 = scmp.ne.s32.totalorder %s262, %s264
      %p271 = scmp.eq.s32.totalorder %s29, 1
      %p272 = por %p270, %p271
      %p273 = scmp.ne.s32.totalorder %s264, %s265
      %p274 = scmp.eq.s32.totalorder %s29, 0
      %p275 = por %p273, %p274
      %p276 = scmp.ne.s32.totalorder %s264, %s265
      %p277 = scmp.eq.s32.totalorder %s30, 1
      %p278 = por %p276, %p277
      %p280 = scmp.ne.s32.totalorder %s265, %s279
      %p281 = scmp.eq.s32.totalorder %s30, 0
      %p282 = por %p280, %p281
      %s284 = sadd.s32 %s283, 1
      %p287 = scmp.eq.s32.totalorder %s24, 1
      %p288 = scmp.ne.s32.totalorder %s283, %s285
      %p289 = scmp.eq.s32.totalorder %s24, 0
      %p290 = por %p288, %p289
      %p291 = scmp.ne.s32.totalorder %s283, %s285
      %p292 = scmp.eq.s32.totalorder %s29, 1
      %p293 = por %p291, %p292
      %p294 = scmp.ne.s32.totalorder %s285, %s286
      %p295 = scmp.eq.s32.totalorder %s29, 0
      %p296 = por %p294, %p295
      %p297 = scmp.ne.s32.totalorder %s285, %s286
      %p298 = scmp.eq.s32.totalorder %s30, 1
      %p299 = por %p297, %p298
      %p301 = scmp.ne.s32.totalorder %s286, %s300
      %p302 = scmp.eq.s32.totalorder %s30, 0
      %p303 = por %p301, %p302
      %s305 = sadd.s32 %s304, 1
      %p308 = scmp.eq.s32.totalorder %s24, 1
      %p309 = scmp.ne.s32.totalorder %s304, %s306
      %p310 = scmp.eq.s32.totalorder %s24, 0
      %p311 = por %p309, %p310
      %p312 = scmp.ne.s32.totalorder %s304, %s306
      %p313 = scmp.eq.s32.totalorder %s29, 1
      %p314 = por %p312, %p313
      %p315 = scmp.ne.s32.totalorder %s306, %s307
      %p316 = scmp.eq.s32.totalorder %s29, 0
      %p317 = por %p315, %p316
      %p318 = scmp.ne.s32.totalorder %s306, %s307
      %p319 = scmp.eq.s32.totalorder %s30, 1
      %p320 = por %p318, %p319
      %p322 = scmp.ne.s32.totalorder %s307, %s321
      %p323 = scmp.eq.s32.totalorder %s30, 0
      %p324 = por %p322, %p323
      %s326 = sadd.s32 %s325, 1
      %p329 = scmp.eq.s32.totalorder %s24, 1
      %p330 = scmp.ne.s32.totalorder %s325, %s327
      %p331 = scmp.eq.s32.totalorder %s24, 0
      %p332 = por %p330, %p331
      %p333 = scmp.ne.s32.totalorder %s325, %s327
      %p334 = scmp.eq.s32.totalorder %s29, 1
      %p335 = por %p333, %p334
      %p336 = scmp.ne.s32.totalorder %s327, %s328
      %p337 = scmp.eq.s32.totalorder %s29, 0
      %p338 = por %p336, %p337
      %p339 = scmp.ne.s32.totalorder %s327, %s328
      %p340 = scmp.eq.s32.totalorder %s30, 1
      %p341 = por %p339, %p340
      %p343 = scmp.ne.s32.totalorder %s328, %s342
      %p344 = scmp.eq.s32.totalorder %s30, 0
      %p345 = por %p343, %p344
      %s347 = sadd.s32 %s346, 1
      %p350 = scmp.eq.s32.totalorder %s24, 1
      %p351 = scmp.ne.s32.totalorder %s346, %s348
      %p352 = scmp.eq.s32.totalorder %s24, 0
      %p353 = por %p351, %p352
      %p354 = scmp.ne.s32.totalorder %s346, %s348
      %p355 = scmp.eq.s32.totalorder %s29, 1
      %p356 = por %p354, %p355
      %p357 = scmp.ne.s32.totalorder %s348, %s349
      %p358 = scmp.eq.s32.totalorder %s29, 0
      %p359 = por %p357, %p358
      %p360 = scmp.ne.s32.totalorder %s348, %s349
      %p361 = scmp.eq.s32.totalorder %s30, 1
      %p362 = por %p360, %p361
      %p364 = scmp.ne.s32.totalorder %s349, %s363
      %p365 = scmp.eq.s32.totalorder %s30, 0
      %p366 = por %p364, %p365
      %s367 = ssub.s32 %s24, %s31
      %p368 = scmp.eq.s32.totalorder %s367, 0
      %s370 = sadd.s32 %s369, 1
      %s371 = scalar_select %p368, %s369, %s370
      %p374 = pneg %p368
      %p375 = scmp.eq.s32.totalorder %s24, 1
      %p376 = por %p374, %p375
      %p377 = scmp.ne.s32.totalorder %s369, %s372
      %p378 = scmp.eq.s32.totalorder %s24, 0
      %p379 = por %p377, %p378
      %p380 = scmp.ne.s32.totalorder %s369, %s372
      %p381 = scmp.eq.s32.totalorder %s29, 1
      %p382 = por %p380, %p381
      %p383 = scmp.ne.s32.totalorder %s372, %s373
      %p384 = scmp.eq.s32.totalorder %s29, 0
      %p385 = por %p383, %p384
      %p386 = scmp.ne.s32.totalorder %s372, %s373
      %p387 = scmp.eq.s32.totalorder %s30, 1
      %p388 = por %p386, %p387
      %p390 = scmp.ne.s32.totalorder %s373, %s389
      %p391 = scmp.eq.s32.totalorder %s30, 0
      %p392 = por %p390, %p391
      %p393 = scmp.le.s32.totalorder 1, %s24
      %p394 = scmp.lt.s32.totalorder %s24, 3
      %p395 = pnand %p393, %p394
      %p396 = pneg %p395
      // Predicated region
      $region9: #{tpu_custom_call.1} parent=5 // pred_check
        _
      $region10: #{tpu_custom_call.1} parent=5 // pred_check_branch
        %398 = sbr.rel (%p395) target = $region12
      $region11: #{tpu_custom_call.1} parent=5 // pred_region
        %s399 = ssub.s32 %s24, 1
        // Predicated region
        $region13: #{tpu_custom_call.1} parent=11 // pred_check
          %p400 = pneg %p149
        $region14: #{tpu_custom_call.1} parent=11 // pred_check_branch
          %402 = sbr.rel (%p400) target = $region16
        $region15: #{tpu_custom_call.1} parent=11 // pred_region
          _
        $region16: #{tpu_custom_call.1} parent=11 // pred_fallthru
          _
        // Predicated region
        $region17: #{tpu_custom_call.1} parent=11 // pred_check
          %p403 = pneg %p170
        $region18: #{tpu_custom_call.1} parent=11 // pred_check_branch
          %405 = sbr.rel (%p403) target = $region20
        $region19: #{tpu_custom_call.1} parent=11 // pred_region
          _
        $region20: #{tpu_custom_call.1} parent=11 // pred_fallthru
          _
        // Predicated region
        $region21: #{tpu_custom_call.1} parent=11 // pred_check
          %p406 = pneg %p191
        $region22: #{tpu_custom_call.1} parent=11 // pred_check_branch
          %408 = sbr.rel (%p406) target = $region24
        $region23: #{tpu_custom_call.1} parent=11 // pred_region
          _
        $region24: #{tpu_custom_call.1} parent=11 // pred_fallthru
          _
        // Predicated region
        $region25: #{tpu_custom_call.1} parent=11 // pred_check
          %p409 = pneg %p212
        $region26: #{tpu_custom_call.1} parent=11 // pred_check_branch
          %411 = sbr.rel (%p409) target = $region28
        $region27: #{tpu_custom_call.1} parent=11 // pred_region
          _
        $region28: #{tpu_custom_call.1} parent=11 // pred_fallthru
          _
        // Predicated region
        $region29: #{tpu_custom_call.1} parent=11 // pred_check
          %p412 = pneg %p233
        $region30: #{tpu_custom_call.1} parent=11 // pred_check_branch
          %414 = sbr.rel (%p412) target = $region32
        $region31: #{tpu_custom_call.1} parent=11 // pred_region
          _
        $region32: #{tpu_custom_call.1} parent=11 // pred_fallthru
          _
        // Predicated region
        $region33: #{tpu_custom_call.1} parent=11 // pred_check
          %p415 = pneg %p254
        $region34: #{tpu_custom_call.1} parent=11 // pred_check_branch
          %417 = sbr.rel (%p415) target = $region36
        $region35: #{tpu_custom_call.1} parent=11 // pred_region
          _
        $region36: #{tpu_custom_call.1} parent=11 // pred_fallthru
          _
        // Predicated region
        $region37: #{tpu_custom_call.1} parent=11 // pred_check
          %p418 = pneg %p275
        $region38: #{tpu_custom_call.1} parent=11 // pred_check_branch
          %420 = sbr.rel (%p418) target = $region40
        $region39: #{tpu_custom_call.1} parent=11 // pred_region
          _
        $region40: #{tpu_custom_call.1} parent=11 // pred_fallthru
          _
        // Predicated region
        $region41: #{tpu_custom_call.1} parent=11 // pred_check
          %p421 = pneg %p296
        $region42: #{tpu_custom_call.1} parent=11 // pred_check_branch
          %423 = sbr.rel (%p421) target = $region44
        $region43: #{tpu_custom_call.1} parent=11 // pred_region
          _
        $region44: #{tpu_custom_call.1} parent=11 // pred_fallthru
          _
        // Predicated region
        $region45: #{tpu_custom_call.1} parent=11 // pred_check
          %p424 = pneg %p317
        $region46: #{tpu_custom_call.1} parent=11 // pred_check_branch
          %426 = sbr.rel (%p424) target = $region48
        $region47: #{tpu_custom_call.1} parent=11 // pred_region
          _
        $region48: #{tpu_custom_call.1} parent=11 // pred_fallthru
          _
        // Predicated region
        $region49: #{tpu_custom_call.1} parent=11 // pred_check
          %p427 = pneg %p338
        $region50: #{tpu_custom_call.1} parent=11 // pred_check_branch
          %429 = sbr.rel (%p427) target = $region52
        $region51: #{tpu_custom_call.1} parent=11 // pred_region
          _
        $region52: #{tpu_custom_call.1} parent=11 // pred_fallthru
          _
        // Predicated region
        $region53: #{tpu_custom_call.1} parent=11 // pred_check
          %p430 = pneg %p359
        $region54: #{tpu_custom_call.1} parent=11 // pred_check_branch
          %432 = sbr.rel (%p430) target = $region56
        $region55: #{tpu_custom_call.1} parent=11 // pred_region
          _
        $region56: #{tpu_custom_call.1} parent=11 // pred_fallthru
          _
      $region12: #{tpu_custom_call.1} parent=5 // pred_fallthru
        _
      %p433 = scmp.lt.s32.totalorder %s24, 2
      // Predicated region
      $region57: #{tpu_custom_call.1} parent=5 // pred_check
        %p434 = pneg %p433
      $region58: #{tpu_custom_call.1} parent=5 // pred_check_branch
        %436 = sbr.rel (%p434) target = $region60
      $region59: #{tpu_custom_call.1} parent=5 // pred_region
        // Predicated region
        $region61: #{tpu_custom_call.1} parent=59 // pred_check
          %p437 = pneg %p44
        $region62: #{tpu_custom_call.1} parent=59 // pred_check_branch
          %439 = sbr.rel (%p437) target = $region64
        $region63: #{tpu_custom_call.1} parent=59 // pred_region
          %s440 = smul.u32 2, %s24
          %p441 = scmp.lt.s32.totalorder %s440, 3
          %s442 = scalar_select %p441, %s440, 3
          %s443 = smul.addr %s442, 2
          %s444 = smul.addr %s443, 8
          %s445 = scalar_lea.vmem %s0, %s444
          %s446 = smul.u32 2, %s24
        $region64: #{tpu_custom_call.1} parent=59 // pred_fallthru
          _
        // Predicated region
        $region65: #{tpu_custom_call.1} parent=59 // pred_check
          %p447 = pneg %p70
        $region66: #{tpu_custom_call.1} parent=59 // pred_check_branch
          %449 = sbr.rel (%p447) target = $region68
        $region67: #{tpu_custom_call.1} parent=59 // pred_region
          %s450 = smul.u32 2, %s24
          %p451 = scmp.lt.s32.totalorder %s450, 3
          %s452 = scalar_select %p451, %s450, 3
          %s453 = smul.addr %s452, 2
          %s454 = smul.addr %s453, 8
          %s455 = scalar_lea.vmem %s1, %s454
          %s456 = smul.u32 2, %s24
        $region68: #{tpu_custom_call.1} parent=59 // pred_fallthru
          _
        // Predicated region
        $region69: #{tpu_custom_call.1} parent=59 // pred_check
          %p457 = pneg %p96
        $region70: #{tpu_custom_call.1} parent=59 // pred_check_branch
          %459 = sbr.rel (%p457) target = $region72
        $region71: #{tpu_custom_call.1} parent=59 // pred_region
          %s460 = smul.u32 2, %s24
          %p461 = scmp.lt.s32.totalorder %s460, 3
          %s462 = scalar_select %p461, %s460, 3
          %s463 = smul.addr %s462, 2
          %s464 = smul.addr %s463, 8
          %s465 = scalar_lea.vmem %s2, %s464
          %s466 = smul.u32 2, %s24
        $region72: #{tpu_custom_call.1} parent=59 // pred_fallthru
          _
        // Predicated region
        $region73: #{tpu_custom_call.1} parent=59 // pred_check
          %p467 = pneg %p122
        $region74: #{tpu_custom_call.1} parent=59 // pred_check_branch
          %469 = sbr.rel (%p467) target = $region76
        $region75: #{tpu_custom_call.1} parent=59 // pred_region
          %s470 = smul.u32 2, %s24
          %p471 = scmp.lt.s32.totalorder %s470, 3
          %s472 = scalar_select %p471, %s470, 3
          %s473 = smul.addr %s472, 2
          %s474 = smul.addr %s473, 8
          %s475 = scalar_lea.vmem %s3, %s474
          %s476 = smul.u32 2, %s24
        $region76: #{tpu_custom_call.1} parent=59 // pred_fallthru
          _
      $region60: #{tpu_custom_call.1} parent=5 // pred_fallthru
        _
      %p477 = scmp.le.s32.totalorder 1, %s24
      %p478 = scmp.lt.s32.totalorder %s24, 3
      %p479 = pnand %p477, %p478
      %p480 = pneg %p479
      // Predicated region
      $region77: #{tpu_custom_call.1} parent=5 // pred_check
        _
      $region78: #{tpu_custom_call.1} parent=5 // pred_check_branch
        %482 = sbr.rel (%p479) target = $region80
      $region79: #{tpu_custom_call.1} parent=5 // pred_region
        %s483 = ssub.s32 %s24, 1
        %s484 = smul.u32 2, %s29
        %p485 = scmp.lt.s32.totalorder %s484, 3
        %s486 = scalar_select %p485, %s484, 3
        %s487 = smul.addr %s486, 2
        %s488 = smul.addr %s487, 8
        %s489 = scalar_lea.vmem %s0, %s488
        %p490 = pneg %p50
        %p491 = pneg %p47
        %s492 = smul.u32 2, %s29
        %p493 = scmp.lt.s32.totalorder %s492, 3
        %s494 = scalar_select %p493, %s492, 3
        %s495 = smul.addr %s494, 2
        %s496 = smul.addr %s495, 8
        %s497 = scalar_lea.vmem %s1, %s496
        %p498 = pneg %p76
        %p499 = pneg %p73
        %s500 = smul.u32 2, %s29
        %p501 = scmp.lt.s32.totalorder %s500, 3
        %s502 = scalar_select %p501, %s500, 3
        %s503 = smul.addr %s502, 2
        %s504 = smul.addr %s503, 8
        %s505 = scalar_lea.vmem %s2, %s504
        %p506 = pneg %p102
        %p507 = pneg %p99
        %s508 = smul.u32 2, %s29
        %p509 = scmp.lt.s32.totalorder %s508, 3
        %s510 = scalar_select %p509, %s508, 3
        %s511 = smul.addr %s510, 2
        %s512 = smul.addr %s511, 8
        %s513 = scalar_lea.vmem %s3, %s512
        %p514 = pneg %p128
        %p515 = pneg %p125
        %p516 = pneg %p149
        %p517 = pneg %p146
        %p518 = pneg %p170
        %p519 = pneg %p167
        %p520 = pneg %p191
        %p521 = pneg %p188
        %p522 = pneg %p212
        %p523 = pneg %p209
        %p524 = pneg %p233
        %p525 = pneg %p230
        %p526 = pneg %p254
        %p527 = pneg %p251
        %p528 = pneg %p275
        %p529 = pneg %p272
        %p530 = pneg %p296
        %p531 = pneg %p293
        %p532 = pneg %p317
        %p533 = pneg %p314
        %p534 = pneg %p338
        %p535 = pneg %p335
        %p536 = pneg %p359
        %p537 = pneg %p356
        %p538 = pneg %p385
        %p539 = pneg %p382
        %s540 = sand.u32 %s372, 1
        %s541 = scalar_lea.sflag [#allocation3], %s540
        %s542 = sand.u32 %s372, 1
        %s543 = smul.addr %s542, 32
        %s544 = scalar_lea.vmem [#allocation2], %s543
        %s545 = smul.u32 2, %s29
        %p546 = scmp.lt.s32.totalorder %s545, 3
        %s547 = scalar_select %p546, %s545, 3
        %s548 = smul.addr %s547, 2
        %s549 = smul.addr %s548, 8
        %s550 = scalar_lea.vmem %s0, %s549
        %s551 = smul.u32 2, %s29
        %s552 = smul.u32 2, %s29
        %p553 = scmp.lt.s32.totalorder %s552, 3
        %s554 = scalar_select %p553, %s552, 3
        %s555 = smul.addr %s554, 2
        %s556 = smul.addr %s555, 8
        %s557 = scalar_lea.vmem %s1, %s556
        %s558 = smul.u32 2, %s29
        %s559 = smul.u32 2, %s29
        %p560 = scmp.lt.s32.totalorder %s559, 3
        %s561 = scalar_select %p560, %s559, 3
        %s562 = smul.addr %s561, 2
        %s563 = smul.addr %s562, 8
        %s564 = scalar_lea.vmem %s2, %s563
        %s565 = smul.u32 2, %s29
        %s566 = smul.u32 2, %s29
        %p567 = scmp.lt.s32.totalorder %s566, 3
        %s568 = scalar_select %p567, %s566, 3
        %s569 = smul.addr %s568, 2
        %s570 = smul.addr %s569, 8
        %s571 = scalar_lea.vmem %s3, %s570
        %s572 = smul.u32 2, %s29
        %s573 = smul.u32 2, %s29
        %v575 = vld [vmem:[%s571] sm:$0xff]
        %v576 = vld [vmem:[%s571 + $0x8] sm:$0xff]
        %v577 = vld [vmem:[%s571 + $0x10] sm:$0xff]
        %v578 = vld [vmem:[%s571 + $0x18] sm:$0xff]
        %v579 = vld [vmem:[%s557] sm:$0xff]
        %v580 = vld [vmem:[%s557 + $0x8] sm:$0xff]
        %v581 = vld [vmem:[%s557 + $0x10] sm:$0xff]
        %v582 = vld [vmem:[%s557 + $0x18] sm:$0xff]
        %v583 = vld [vmem:[%s4] sm:$0x1]
        %v585 = vperm.slane %v583, 0
        %v587 = vmul.f32 %v579, %v585
        %v588 = vmul.f32 %v580, %v585
        %v589 = vmul.f32 %v581, %v585
        %v590 = vmul.f32 %v582, %v585
        %v591 = vld [vmem:[%s5] sm:$0x1]
        %v593 = vperm.slane %v591, 0
        %v595 = vadd.f32 %v587, %v593
        %v596 = vadd.f32 %v588, %v593
        %v597 = vadd.f32 %v589, %v593
        %v598 = vadd.f32 %v590, %v593
        %600 = vset.pattern.permute.xlu0 0
        %601 = vperm.xlu0 %600, %v575
        %v602 = vpop.permute.xlu0 %601
        %605 = vset.pattern.permute.xlu0 0
        %606 = vperm.xlu0 %605, %v576
        %v607 = vpop.permute.xlu0 %606
        %610 = vset.pattern.permute.xlu0 0
        %611 = vperm.xlu0 %610, %v577
        %v612 = vpop.permute.xlu0 %611
        %615 = vset.pattern.permute.xlu0 0
        %616 = vperm.xlu0 %615, %v578
        %v617 = vpop.permute.xlu0 %616
        %v619 = vmul.f32 %v595, %v602
        %v620 = vmul.f32 %v596, %v607
        %v621 = vmul.f32 %v597, %v612
        %v622 = vmul.f32 %v598, %v617
        %v623 = vld [vmem:[%s550] sm:$0xff]
        %v624 = vld [vmem:[%s550 + $0x8] sm:$0xff]
        %v625 = vld [vmem:[%s550 + $0x10] sm:$0xff]
        %v626 = vld [vmem:[%s550 + $0x18] sm:$0xff]
        %v627 = vld [vmem:[%s564] sm:$0xff]
        %v628 = vld [vmem:[%s564 + $0x8] sm:$0xff]
        %v629 = vld [vmem:[%s564 + $0x10] sm:$0xff]
        %v630 = vld [vmem:[%s564 + $0x18] sm:$0xff]
        %632 = vset.pattern.permute.xlu0 0
        %633 = vperm.xlu0 %632, %v627
        %v634 = vpop.permute.xlu0 %633
        %637 = vset.pattern.permute.xlu0 0
        %638 = vperm.xlu0 %637, %v628
        %v639 = vpop.permute.xlu0 %638
        %642 = vset.pattern.permute.xlu0 0
        %643 = vperm.xlu0 %642, %v629
        %v644 = vpop.permute.xlu0 %643
        %647 = vset.pattern.permute.xlu0 0
        %648 = vperm.xlu0 %647, %v630
        %v649 = vpop.permute.xlu0 %648
        %v651 = vadd.f32 %v623, %v634
        %v652 = vadd.f32 %v624, %v639
        %v653 = vadd.f32 %v625, %v644
        %v654 = vadd.f32 %v626, %v649
        %vm655 = vcmask 15360
        %v657 = vsel %vm655, %v651, 0
        %v660 = vsel %vm655, %v652, 0
        %662 = vmatpush.xpose.msra.mxu0 0.0
        %663 = vmatpush.xpose.msra.mxu0 0.0
        %664 = vmatpush.xpose.msra.mxu0 0.0
        %665 = vmatpush.xpose.msra.mxu0 0.0
        %666 = vmatpush.xpose.msra.mxu0 0.0
        %667 = vmatpush.xpose.msra.mxu0 0.0
        %668 = vmatpush.xpose.msra.mxu0 0.0
        %669 = vmatpush.xpose.msra.mxu0 0.0
        %670 = vmatpush.xpose.msra.mxu0 0.0
        %671 = vmatpush.xpose.msra.mxu0 0.0
        %672 = vmatpush.xpose.msra.mxu0 0.0
        %673 = vmatpush.xpose.msra.mxu0 0.0
        %674 = vmatpush.xpose.msra.mxu0 0.0
        %675 = vmatpush.xpose.msra.mxu0 0.0
        %676 = vmatpush.xpose.msra.mxu0 %v660
        %677 = vmatpush.xpose.msra.mxu0 %v657
        %678 = vmatmul.f32.gmra.mxu0 %v657
        %v679 = vpop.f32.mrf.mxu0
        %v680 = vadd.f32 0.0, %v679
        %681 = vmatmul.f32.gmra.mxu0 %v660
        %v682 = vpop.f32.mrf.mxu0
        %v683 = vadd.f32 0.0, %v682
        %684 = vdwg.mxu0
        %v686 = vsel %vm655, %v653, 0
        %v689 = vsel %vm655, %v654, 0
        %691 = vmatpush.xpose.msra.mxu0 0.0
        %692 = vmatpush.xpose.msra.mxu0 0.0
        %693 = vmatpush.xpose.msra.mxu0 0.0
        %694 = vmatpush.xpose.msra.mxu0 0.0
        %695 = vmatpush.xpose.msra.mxu0 0.0
        %696 = vmatpush.xpose.msra.mxu0 0.0
        %697 = vmatpush.xpose.msra.mxu0 0.0
        %698 = vmatpush.xpose.msra.mxu0 0.0
        %699 = vmatpush.xpose.msra.mxu0 0.0
        %700 = vmatpush.xpose.msra.mxu0 0.0
        %701 = vmatpush.xpose.msra.mxu0 0.0
        %702 = vmatpush.xpose.msra.mxu0 0.0
        %703 = vmatpush.xpose.msra.mxu0 0.0
        %704 = vmatpush.xpose.msra.mxu0 0.0
        %705 = vmatpush.xpose.msra.mxu0 %v689
        %706 = vmatpush.xpose.msra.mxu0 %v686
        %707 = vmatmul.f32.gmra.mxu0 %v686
        %v708 = vpop.f32.mrf.mxu0
        %v709 = vadd.f32 0.0, %v708
        %710 = vmatmul.f32.gmra.mxu0 %v689
        %v711 = vpop.f32.mrf.mxu0
        %v712 = vadd.f32 0.0, %v711
        %713 = vdwg.mxu0
        %v714 = vmul.f32 %v651, %v651
        %v715 = vmul.f32 %v652, %v652
        %v716 = vmul.f32 %v653, %v653
        %v717 = vmul.f32 %v654, %v654
        %v718 = vsel %vm655, %v714, 0.0
        %719 = vadd.xlane.f32.xlu0 %v718
        %v720 = vpop.xlane.xlu0 %719
        %v721 = vsel %vm655, %v715, 0.0
        %722 = vadd.xlane.f32.xlu0 %v721
        %v723 = vpop.xlane.xlu0 %722
        %v724 = vsel %vm655, %v716, 0.0
        %725 = vadd.xlane.f32.xlu0 %v724
        %v726 = vpop.xlane.xlu0 %725
        %v727 = vsel %vm655, %v717, 0.0
        %728 = vadd.xlane.f32.xlu0 %v727
        %v729 = vpop.xlane.xlu0 %728
        %v730 = vmul.f32 %v680, 2.0
        %v731 = vmul.f32 %v683, 2.0
        %v732 = vmul.f32 %v709, 2.0
        %v733 = vmul.f32 %v712, 2.0
        %v738 = vlaneseq
        %v739 = vand.u32 %v738, 127
        %v740 = vperm.slane %v720, %v739
        %v741 = vadd.s32 %v739, 4294967288
        %v742 = vperm.slane %v723, %v741
        %vm743 = vcmask 130112
        %v744 = vsel %vm743, %v742, %v740
        %v745 = vperm.slane %v726, %v739
        %v746 = vperm.slane %v729, %v741
        %v747 = vsel %vm743, %v746, %v745
        %vm748 = vcmask 1042434
        %v749 = vsel %vm748, %v744, %v744
        %vm750 = vcmask 1043459
        %v751 = vsel %vm750, %v744, %v749
        %vm752 = vcmask 1044484
        %v753 = vsel %vm752, %v744, %v751
        %vm754 = vcmask 1045509
        %v755 = vsel %vm754, %v744, %v753
        %vm756 = vcmask 1046534
        %v757 = vsel %vm756, %v744, %v755
        %vm758 = vcmask 1047559
        %v759 = vsel %vm758, %v744, %v757
        %v760 = vsel %vm748, %v747, %v747
        %v761 = vsel %vm750, %v747, %v760
        %v762 = vsel %vm752, %v747, %v761
        %v763 = vsel %vm754, %v747, %v762
        %v764 = vsel %vm756, %v747, %v763
        %v765 = vsel %vm758, %v747, %v764
        %v768 = vsub.f32 %v730, %v759
        %v769 = vsub.f32 %v731, %v759
        %v770 = vsub.f32 %v732, %v765
        %v771 = vsub.f32 %v733, %v765
        %v772 = vcvt.s32.f32 %v739
        %vm773 = vcmask 130048
        %v774 = vsel %vm773, %v768, -inf
        %775 = vmax.xlane.f32.xlu0 %v774
        %v776 = vpop.xlane.xlu0 %775
        %v777 = vsel %vm773, %v769, -inf
        %778 = vmax.xlane.f32.xlu0 %v777
        %v779 = vpop.xlane.xlu0 %778
        %v780 = vsel %vm773, %v770, -inf
        %781 = vmax.xlane.f32.xlu0 %v780
        %v782 = vpop.xlane.xlu0 %781
        %v783 = vsel %vm773, %v771, -inf
        %784 = vmax.xlane.f32.xlu0 %v783
        %v785 = vpop.xlane.xlu0 %784
        %vm786 = vcmp.eq.f32.partialorder %v768, %v776
        %vm787 = vcmp.eq.f32.partialorder %v769, %v779
        %vm788 = vcmp.eq.f32.partialorder %v770, %v782
        %vm789 = vcmp.eq.f32.partialorder %v771, %v785
        %v790 = vsel %vm786, %v772, 16.0
        %v791 = vsel %vm787, %v772, 16.0
        %v792 = vsel %vm788, %v772, 16.0
        %v793 = vsel %vm789, %v772, 16.0
        %v794 = vsel %vm773, %v790, inf
        %795 = vmin.xlane.f32.xlu0 %v794
        %v796 = vpop.xlane.xlu0 %795
        %v797 = vsel %vm773, %v791, inf
        %798 = vmin.xlane.f32.xlu0 %v797
        %v799 = vpop.xlane.xlu0 %798
        %v800 = vsel %vm773, %v792, inf
        %801 = vmin.xlane.f32.xlu0 %v800
        %v802 = vpop.xlane.xlu0 %801
        %v803 = vsel %vm773, %v793, inf
        %804 = vmin.xlane.f32.xlu0 %v803
        %v805 = vpop.xlane.xlu0 %804
        %v806 = vcvt.f32.s32.to.zero.pseudo %v796
        %v807 = vcvt.f32.s32.to.zero.pseudo %v799
        %v808 = vcvt.f32.s32.to.zero.pseudo %v802
        %v809 = vcvt.f32.s32.to.zero.pseudo %v805
        %vm810 = vcmp.eq.s32.totalorder %v739, %v806
        %vm811 = vcmp.eq.s32.totalorder %v739, %v807
        %vm812 = vcmp.eq.s32.totalorder %v739, %v808
        %vm813 = vcmp.eq.s32.totalorder %v739, %v809
        %v814 = vsel %vm810, -inf, %v768
        %v815 = vsel %vm811, -inf, %v769
        %v816 = vsel %vm812, -inf, %v770
        %v817 = vsel %vm813, -inf, %v771
        %v818 = vsel %vm773, %v814, -inf
        %819 = vmax.xlane.f32.xlu0 %v818
        %v820 = vpop.xlane.xlu0 %819
        %v821 = vsel %vm773, %v815, -inf
        %822 = vmax.xlane.f32.xlu0 %v821
        %v823 = vpop.xlane.xlu0 %822
        %v824 = vsel %vm773, %v816, -inf
        %825 = vmax.xlane.f32.xlu0 %v824
        %v826 = vpop.xlane.xlu0 %825
        %v827 = vsel %vm773, %v817, -inf
        %828 = vmax.xlane.f32.xlu0 %v827
        %v829 = vpop.xlane.xlu0 %828
        %vm830 = vcmp.eq.f32.partialorder %v814, %v820
        %vm831 = vcmp.eq.f32.partialorder %v815, %v823
        %vm832 = vcmp.eq.f32.partialorder %v816, %v826
        %vm833 = vcmp.eq.f32.partialorder %v817, %v829
        %v834 = vsel %vm830, %v772, 16.0
        %v835 = vsel %vm831, %v772, 16.0
        %v836 = vsel %vm832, %v772, 16.0
        %v837 = vsel %vm833, %v772, 16.0
        %v838 = vsel %vm773, %v834, inf
        %839 = vmin.xlane.f32.xlu0 %v838
        %v840 = vpop.xlane.xlu0 %839
        %v841 = vsel %vm773, %v835, inf
        %842 = vmin.xlane.f32.xlu0 %v841
        %v843 = vpop.xlane.xlu0 %842
        %v844 = vsel %vm773, %v836, inf
        %845 = vmin.xlane.f32.xlu0 %v844
        %v846 = vpop.xlane.xlu0 %845
        %v847 = vsel %vm773, %v837, inf
        %848 = vmin.xlane.f32.xlu0 %v847
        %v849 = vpop.xlane.xlu0 %848
        %v850 = vcvt.f32.s32.to.zero.pseudo %v840
        %v851 = vcvt.f32.s32.to.zero.pseudo %v843
        %v852 = vcvt.f32.s32.to.zero.pseudo %v846
        %v853 = vcvt.f32.s32.to.zero.pseudo %v849
        %vm854 = vcmp.eq.s32.totalorder %v739, %v850
        %vm855 = vcmp.eq.s32.totalorder %v739, %v851
        %vm856 = vcmp.eq.s32.totalorder %v739, %v852
        %vm857 = vcmp.eq.s32.totalorder %v739, %v853
        %v858 = vsel %vm854, -inf, %v814
        %v859 = vsel %vm855, -inf, %v815
        %v860 = vsel %vm856, -inf, %v816
        %v861 = vsel %vm857, -inf, %v817
        %v862 = vadd.s32 %v852, 16
        %v863 = vadd.s32 %v853, 16
        %v864 = vsel %vm773, %v858, -inf
        %865 = vmax.xlane.f32.xlu0 %v864
        %v866 = vpop.xlane.xlu0 %865
        %v867 = vsel %vm773, %v859, -inf
        %868 = vmax.xlane.f32.xlu0 %v867
        %v869 = vpop.xlane.xlu0 %868
        %v870 = vsel %vm773, %v860, -inf
        %871 = vmax.xlane.f32.xlu0 %v870
        %v872 = vpop.xlane.xlu0 %871
        %v873 = vsel %vm773, %v861, -inf
        %874 = vmax.xlane.f32.xlu0 %v873
        %v875 = vpop.xlane.xlu0 %874
        %vm876 = vcmp.eq.f32.partialorder %v858, %v866
        %vm877 = vcmp.eq.f32.partialorder %v859, %v869
        %vm878 = vcmp.eq.f32.partialorder %v860, %v872
        %vm879 = vcmp.eq.f32.partialorder %v861, %v875
        %v880 = vsel %vm876, %v772, 16.0
        %v881 = vsel %vm877, %v772, 16.0
        %v882 = vsel %vm878, %v772, 16.0
        %v883 = vsel %vm879, %v772, 16.0
        %v884 = vsel %vm773, %v880, inf
        %885 = vmin.xlane.f32.xlu0 %v884
        %v886 = vpop.xlane.xlu0 %885
        %v887 = vsel %vm773, %v881, inf
        %888 = vmin.xlane.f32.xlu0 %v887
        %v889 = vpop.xlane.xlu0 %888
        %v890 = vsel %vm773, %v882, inf
        %891 = vmin.xlane.f32.xlu0 %v890
        %v892 = vpop.xlane.xlu0 %891
        %v893 = vsel %vm773, %v883, inf
        %894 = vmin.xlane.f32.xlu0 %v893
        %v895 = vpop.xlane.xlu0 %894
        %v896 = vcvt.f32.s32.to.zero.pseudo %v886
        %v897 = vcvt.f32.s32.to.zero.pseudo %v889
        %v898 = vcvt.f32.s32.to.zero.pseudo %v892
        %v899 = vcvt.f32.s32.to.zero.pseudo %v895
        %vm900 = vcmp.eq.s32.totalorder %v739, %v896
        %vm901 = vcmp.eq.s32.totalorder %v739, %v897
        %vm902 = vcmp.eq.s32.totalorder %v739, %v898
        %vm903 = vcmp.eq.s32.totalorder %v739, %v899
        %v904 = vsel %vm900, -inf, %v858
        %v905 = vsel %vm901, -inf, %v859
        %v906 = vsel %vm902, -inf, %v860
        %v907 = vsel %vm903, -inf, %v861
        %v908 = vadd.s32 %v898, 16
        %v909 = vadd.s32 %v899, 16
        %v910 = vsel %vm773, %v904, -inf
        %911 = vmax.xlane.f32.xlu0 %v910
        %v912 = vpop.xlane.xlu0 %911
        %v913 = vsel %vm773, %v905, -inf
        %914 = vmax.xlane.f32.xlu0 %v913
        %v915 = vpop.xlane.xlu0 %914
        %v916 = vsel %vm773, %v906, -inf
        %917 = vmax.xlane.f32.xlu0 %v916
        %v918 = vpop.xlane.xlu0 %917
        %v919 = vsel %vm773, %v907, -inf
        %920 = vmax.xlane.f32.xlu0 %v919
        %v921 = vpop.xlane.xlu0 %920
        %vm922 = vcmp.eq.f32.partialorder %v904, %v912
        %vm923 = vcmp.eq.f32.partialorder %v905, %v915
        %vm924 = vcmp.eq.f32.partialorder %v906, %v918
        %vm925 = vcmp.eq.f32.partialorder %v907, %v921
        %v926 = vsel %vm922, %v772, 16.0
        %v927 = vsel %vm923, %v772, 16.0
        %v928 = vsel %vm924, %v772, 16.0
        %v929 = vsel %vm925, %v772, 16.0
        %v930 = vsel %vm773, %v926, inf
        %931 = vmin.xlane.f32.xlu0 %v930
        %v932 = vpop.xlane.xlu0 %931
        %v933 = vsel %vm773, %v927, inf
        %934 = vmin.xlane.f32.xlu0 %v933
        %v935 = vpop.xlane.xlu0 %934
        %v936 = vsel %vm773, %v928, inf
        %937 = vmin.xlane.f32.xlu0 %v936
        %v938 = vpop.xlane.xlu0 %937
        %v939 = vsel %vm773, %v929, inf
        %940 = vmin.xlane.f32.xlu0 %v939
        %v941 = vpop.xlane.xlu0 %940
        %v942 = vcvt.f32.s32.to.zero.pseudo %v932
        %v943 = vcvt.f32.s32.to.zero.pseudo %v935
        %v944 = vcvt.f32.s32.to.zero.pseudo %v938
        %v945 = vcvt.f32.s32.to.zero.pseudo %v941
        %vm946 = vcmp.eq.s32.totalorder %v739, %v942
        %vm947 = vcmp.eq.s32.totalorder %v739, %v943
        %vm948 = vcmp.eq.s32.totalorder %v739, %v944
        %vm949 = vcmp.eq.s32.totalorder %v739, %v945
        %v950 = vsel %vm946, -inf, %v904
        %v951 = vsel %vm947, -inf, %v905
        %v952 = vsel %vm948, -inf, %v906
        %v953 = vsel %vm949, -inf, %v907
        %v954 = vadd.s32 %v944, 16
        %v955 = vadd.s32 %v945, 16
        %v956 = vsel %vm773, %v950, -inf
        %957 = vmax.xlane.f32.xlu0 %v956
        %v958 = vpop.xlane.xlu0 %957
        %v959 = vsel %vm773, %v951, -inf
        %960 = vmax.xlane.f32.xlu0 %v959
        %v961 = vpop.xlane.xlu0 %960
        %v962 = vsel %vm773, %v952, -inf
        %963 = vmax.xlane.f32.xlu0 %v962
        %v964 = vpop.xlane.xlu0 %963
        %v965 = vsel %vm773, %v953, -inf
        %966 = vmax.xlane.f32.xlu0 %v965
        %v967 = vpop.xlane.xlu0 %966
        %vm968 = vcmp.eq.f32.partialorder %v950, %v958
        %vm969 = vcmp.eq.f32.partialorder %v951, %v961
        %vm970 = vcmp.eq.f32.partialorder %v952, %v964
        %vm971 = vcmp.eq.f32.partialorder %v953, %v967
        %v972 = vsel %vm968, %v772, 16.0
        %v973 = vsel %vm969, %v772, 16.0
        %v974 = vsel %vm970, %v772, 16.0
        %v975 = vsel %vm971, %v772, 16.0
        %v976 = vsel %vm773, %v972, inf
        %977 = vmin.xlane.f32.xlu0 %v976
        %v978 = vpop.xlane.xlu0 %977
        %v979 = vsel %vm773, %v973, inf
        %980 = vmin.xlane.f32.xlu0 %v979
        %v981 = vpop.xlane.xlu0 %980
        %v982 = vsel %vm773, %v974, inf
        %983 = vmin.xlane.f32.xlu0 %v982
        %v984 = vpop.xlane.xlu0 %983
        %v985 = vsel %vm773, %v975, inf
        %986 = vmin.xlane.f32.xlu0 %v985
        %v987 = vpop.xlane.xlu0 %986
        %v988 = vcvt.f32.s32.to.zero.pseudo %v978
        %v989 = vcvt.f32.s32.to.zero.pseudo %v981
        %v990 = vcvt.f32.s32.to.zero.pseudo %v984
        %v991 = vcvt.f32.s32.to.zero.pseudo %v987
        %vm992 = vcmp.eq.s32.totalorder %v739, %v988
        %vm993 = vcmp.eq.s32.totalorder %v739, %v989
        %vm994 = vcmp.eq.s32.totalorder %v739, %v990
        %vm995 = vcmp.eq.s32.totalorder %v739, %v991
        %v996 = vsel %vm992, -inf, %v950
        %v997 = vsel %vm993, -inf, %v951
        %v998 = vsel %vm994, -inf, %v952
        %v999 = vsel %vm995, -inf, %v953
        %v1000 = vadd.s32 %v990, 16
        %v1001 = vadd.s32 %v991, 16
        %v1002 = vsel %vm773, %v996, -inf
        %1003 = vmax.xlane.f32.xlu0 %v1002
        %v1004 = vpop.xlane.xlu0 %1003
        %v1005 = vsel %vm773, %v997, -inf
        %1006 = vmax.xlane.f32.xlu0 %v1005
        %v1007 = vpop.xlane.xlu0 %1006
        %v1008 = vsel %vm773, %v998, -inf
        %1009 = vmax.xlane.f32.xlu0 %v1008
        %v1010 = vpop.xlane.xlu0 %1009
        %v1011 = vsel %vm773, %v999, -inf
        %1012 = vmax.xlane.f32.xlu0 %v1011
        %v1013 = vpop.xlane.xlu0 %1012
        %vm1014 = vcmp.eq.f32.partialorder %v996, %v1004
        %vm1015 = vcmp.eq.f32.partialorder %v997, %v1007
        %vm1016 = vcmp.eq.f32.partialorder %v998, %v1010
        %vm1017 = vcmp.eq.f32.partialorder %v999, %v1013
        %v1018 = vsel %vm1014, %v772, 16.0
        %v1019 = vsel %vm1015, %v772, 16.0
        %v1020 = vsel %vm1016, %v772, 16.0
        %v1021 = vsel %vm1017, %v772, 16.0
        %v1022 = vsel %vm773, %v1018, inf
        %1023 = vmin.xlane.f32.xlu0 %v1022
        %v1024 = vpop.xlane.xlu0 %1023
        %v1025 = vsel %vm773, %v1019, inf
        %1026 = vmin.xlane.f32.xlu0 %v1025
        %v1027 = vpop.xlane.xlu0 %1026
        %v1028 = vsel %vm773, %v1020, inf
        %1029 = vmin.xlane.f32.xlu0 %v1028
        %v1030 = vpop.xlane.xlu0 %1029
        %v1031 = vsel %vm773, %v1021, inf
        %1032 = vmin.xlane.f32.xlu0 %v1031
        %v1033 = vpop.xlane.xlu0 %1032
        %v1034 = vcvt.f32.s32.to.zero.pseudo %v1024
        %v1035 = vcvt.f32.s32.to.zero.pseudo %v1027
        %v1036 = vcvt.f32.s32.to.zero.pseudo %v1030
        %v1037 = vcvt.f32.s32.to.zero.pseudo %v1033
        %vm1038 = vcmp.eq.s32.totalorder %v739, %v1034
        %vm1039 = vcmp.eq.s32.totalorder %v739, %v1035
        %vm1040 = vcmp.eq.s32.totalorder %v739, %v1036
        %vm1041 = vcmp.eq.s32.totalorder %v739, %v1037
        %v1042 = vsel %vm1038, -inf, %v996
        %v1043 = vsel %vm1039, -inf, %v997
        %v1044 = vsel %vm1040, -inf, %v998
        %v1045 = vsel %vm1041, -inf, %v999
        %v1046 = vadd.s32 %v1036, 16
        %v1047 = vadd.s32 %v1037, 16
        %v1048 = vsel %vm773, %v1042, -inf
        %1049 = vmax.xlane.f32.xlu0 %v1048
        %v1050 = vpop.xlane.xlu0 %1049
        %v1051 = vsel %vm773, %v1043, -inf
        %1052 = vmax.xlane.f32.xlu0 %v1051
        %v1053 = vpop.xlane.xlu0 %1052
        %v1054 = vsel %vm773, %v1044, -inf
        %1055 = vmax.xlane.f32.xlu0 %v1054
        %v1056 = vpop.xlane.xlu0 %1055
        %v1057 = vsel %vm773, %v1045, -inf
        %1058 = vmax.xlane.f32.xlu0 %v1057
        %v1059 = vpop.xlane.xlu0 %1058
        %vm1060 = vcmp.eq.f32.partialorder %v1042, %v1050
        %vm1061 = vcmp.eq.f32.partialorder %v1043, %v1053
        %vm1062 = vcmp.eq.f32.partialorder %v1044, %v1056
        %vm1063 = vcmp.eq.f32.partialorder %v1045, %v1059
        %v1064 = vsel %vm1060, %v772, 16.0
        %v1065 = vsel %vm1061, %v772, 16.0
        %v1066 = vsel %vm1062, %v772, 16.0
        %v1067 = vsel %vm1063, %v772, 16.0
        %v1068 = vsel %vm773, %v1064, inf
        %1069 = vmin.xlane.f32.xlu0 %v1068
        %v1070 = vpop.xlane.xlu0 %1069
        %v1071 = vsel %vm773, %v1065, inf
        %1072 = vmin.xlane.f32.xlu0 %v1071
        %v1073 = vpop.xlane.xlu0 %1072
        %v1074 = vsel %vm773, %v1066, inf
        %1075 = vmin.xlane.f32.xlu0 %v1074
        %v1076 = vpop.xlane.xlu0 %1075
        %v1077 = vsel %vm773, %v1067, inf
        %1078 = vmin.xlane.f32.xlu0 %v1077
        %v1079 = vpop.xlane.xlu0 %1078
        %v1080 = vcvt.f32.s32.to.zero.pseudo %v1070
        %v1081 = vcvt.f32.s32.to.zero.pseudo %v1073
        %v1082 = vcvt.f32.s32.to.zero.pseudo %v1076
        %v1083 = vcvt.f32.s32.to.zero.pseudo %v1079
        %vm1084 = vcmp.eq.s32.totalorder %v739, %v1080
        %vm1085 = vcmp.eq.s32.totalorder %v739, %v1081
        %vm1086 = vcmp.eq.s32.totalorder %v739, %v1082
        %vm1087 = vcmp.eq.s32.totalorder %v739, %v1083
        %v1088 = vsel %vm1084, -inf, %v1042
        %v1089 = vsel %vm1085, -inf, %v1043
        %v1090 = vsel %vm1086, -inf, %v1044
        %v1091 = vsel %vm1087, -inf, %v1045
        %v1092 = vadd.s32 %v1082, 16
        %v1093 = vadd.s32 %v1083, 16
        %v1094 = vsel %vm773, %v1088, -inf
        %1095 = vmax.xlane.f32.xlu0 %v1094
        %v1096 = vpop.xlane.xlu0 %1095
        %v1097 = vsel %vm773, %v1089, -inf
        %1098 = vmax.xlane.f32.xlu0 %v1097
        %v1099 = vpop.xlane.xlu0 %1098
        %v1100 = vsel %vm773, %v1090, -inf
        %1101 = vmax.xlane.f32.xlu0 %v1100
        %v1102 = vpop.xlane.xlu0 %1101
        %v1103 = vsel %vm773, %v1091, -inf
        %1104 = vmax.xlane.f32.xlu0 %v1103
        %v1105 = vpop.xlane.xlu0 %1104
        %vm1106 = vcmp.eq.f32.partialorder %v1088, %v1096
        %vm1107 = vcmp.eq.f32.partialorder %v1089, %v1099
        %vm1108 = vcmp.eq.f32.partialorder %v1090, %v1102
        %vm1109 = vcmp.eq.f32.partialorder %v1091, %v1105
        %v1110 = vsel %vm1106, %v772, 16.0
        %v1111 = vsel %vm1107, %v772, 16.0
        %v1112 = vsel %vm1108, %v772, 16.0
        %v1113 = vsel %vm1109, %v772, 16.0
        %v1114 = vsel %vm773, %v1110, inf
        %1115 = vmin.xlane.f32.xlu0 %v1114
        %v1116 = vpop.xlane.xlu0 %1115
        %v1117 = vsel %vm773, %v1111, inf
        %1118 = vmin.xlane.f32.xlu0 %v1117
        %v1119 = vpop.xlane.xlu0 %1118
        %v1120 = vsel %vm773, %v1112, inf
        %1121 = vmin.xlane.f32.xlu0 %v1120
        %v1122 = vpop.xlane.xlu0 %1121
        %v1123 = vsel %vm773, %v1113, inf
        %1124 = vmin.xlane.f32.xlu0 %v1123
        %v1125 = vpop.xlane.xlu0 %1124
        %v1126 = vcvt.f32.s32.to.zero.pseudo %v1116
        %v1127 = vcvt.f32.s32.to.zero.pseudo %v1119
        %v1128 = vcvt.f32.s32.to.zero.pseudo %v1122
        %v1129 = vcvt.f32.s32.to.zero.pseudo %v1125
        %v1130 = vadd.s32 %v1128, 16
        %v1131 = vadd.s32 %v1129, 16
        %v1132 = vpack.c.bf16 %v620, %v619
        %v1133 = vpack.c.bf16 %v622, %v621
        %v1134 = vlaneseq
        %v1135 = vshrl.u32 %v1134, 7
        %v1136 = vadd.s32 %v1135, 8
        %v1137 = vadd.s32 %v1135, 16
        %v1138 = vadd.s32 %v1135, 24
        %1139 = vset.pattern.permute.xlu0 0
        %1140 = vperm.xlu0 %1139, %v850
        %v1141 = vpop.permute.xlu0 %1140
        %1142 = vset.pattern.permute.xlu0 0
        %1143 = vperm.xlu0 %1142, %v851
        %v1144 = vpop.permute.xlu0 %1143
        %1145 = vset.pattern.permute.xlu0 0
        %1146 = vperm.xlu0 %1145, %v862
        %v1147 = vpop.permute.xlu0 %1146
        %1148 = vset.pattern.permute.xlu0 0
        %1149 = vperm.xlu0 %1148, %v863
        %v1150 = vpop.permute.xlu0 %1149
        %1151 = vset.pattern.permute.xlu0 0
        %1152 = vperm.xlu0 %1151, %v896
        %v1153 = vpop.permute.xlu0 %1152
        %1154 = vset.pattern.permute.xlu0 0
        %1155 = vperm.xlu0 %1154, %v897
        %v1156 = vpop.permute.xlu0 %1155
        %1157 = vset.pattern.permute.xlu0 0
        %1158 = vperm.xlu0 %1157, %v908
        %v1159 = vpop.permute.xlu0 %1158
        %1160 = vset.pattern.permute.xlu0 0
        %1161 = vperm.xlu0 %1160, %v909
        %v1162 = vpop.permute.xlu0 %1161
        %1163 = vset.pattern.permute.xlu0 0
        %1164 = vperm.xlu0 %1163, %v942
        %v1165 = vpop.permute.xlu0 %1164
        %1166 = vset.pattern.permute.xlu0 0
        %1167 = vperm.xlu0 %1166, %v943
        %v1168 = vpop.permute.xlu0 %1167
        %1169 = vset.pattern.permute.xlu0 0
        %1170 = vperm.xlu0 %1169, %v954
        %v1171 = vpop.permute.xlu0 %1170
        %1172 = vset.pattern.permute.xlu0 0
        %1173 = vperm.xlu0 %1172, %v955
        %v1174 = vpop.permute.xlu0 %1173
        %1175 = vset.pattern.permute.xlu0 0
        %1176 = vperm.xlu0 %1175, %v988
        %v1177 = vpop.permute.xlu0 %1176
        %1178 = vset.pattern.permute.xlu0 0
        %1179 = vperm.xlu0 %1178, %v989
        %v1180 = vpop.permute.xlu0 %1179
        %1181 = vset.pattern.permute.xlu0 0
        %1182 = vperm.xlu0 %1181, %v1000
        %v1183 = vpop.permute.xlu0 %1182
        %1184 = vset.pattern.permute.xlu0 0
        %1185 = vperm.xlu0 %1184, %v1001
        %v1186 = vpop.permute.xlu0 %1185
        %1187 = vset.pattern.permute.xlu0 0
        %1188 = vperm.xlu0 %1187, %v1034
        %v1189 = vpop.permute.xlu0 %1188
        %1190 = vset.pattern.permute.xlu0 0
        %1191 = vperm.xlu0 %1190, %v1035
        %v1192 = vpop.permute.xlu0 %1191
        %1193 = vset.pattern.permute.xlu0 0
        %1194 = vperm.xlu0 %1193, %v1046
        %v1195 = vpop.permute.xlu0 %1194
        %1196 = vset.pattern.permute.xlu0 0
        %1197 = vperm.xlu0 %1196, %v1047
        %v1198 = vpop.permute.xlu0 %1197
        %1199 = vset.pattern.permute.xlu0 0
        %1200 = vperm.xlu0 %1199, %v1080
        %v1201 = vpop.permute.xlu0 %1200
        %1202 = vset.pattern.permute.xlu0 0
        %1203 = vperm.xlu0 %1202, %v1081
        %v1204 = vpop.permute.xlu0 %1203
        %1205 = vset.pattern.permute.xlu0 0
        %1206 = vperm.xlu0 %1205, %v1092
        %v1207 = vpop.permute.xlu0 %1206
        %1208 = vset.pattern.permute.xlu0 0
        %1209 = vperm.xlu0 %1208, %v1093
        %v1210 = vpop.permute.xlu0 %1209
        %1211 = vset.pattern.permute.xlu0 0
        %1212 = vperm.xlu0 %1211, %v1126
        %v1213 = vpop.permute.xlu0 %1212
        %1214 = vset.pattern.permute.xlu0 0
        %1215 = vperm.xlu0 %1214, %v1127
        %v1216 = vpop.permute.xlu0 %1215
        %1217 = vset.pattern.permute.xlu0 0
        %1218 = vperm.xlu0 %1217, %v1130
        %v1219 = vpop.permute.xlu0 %1218
        %1220 = vset.pattern.permute.xlu0 0
        %1221 = vperm.xlu0 %1220, %v1131
        %v1222 = vpop.permute.xlu0 %1221
        %vm1223 = vcmp.eq.s32.totalorder %v739, %v1141
        %vm1224 = vcmp.eq.s32.totalorder %v739, %v1144
        %vm1225 = vcmp.eq.s32.totalorder %v739, %v1147
        %vm1226 = vcmp.eq.s32.totalorder %v739, %v1150
        %vm1227 = vcmp.eq.s32.totalorder %v739, %v1153
        %vm1228 = vcmp.eq.s32.totalorder %v739, %v1156
        %vm1229 = vcmp.eq.s32.totalorder %v739, %v1159
        %vm1230 = vcmp.eq.s32.totalorder %v739, %v1162
        %vm1231 = vcmp.eq.s32.totalorder %v739, %v1165
        %vm1232 = vcmp.eq.s32.totalorder %v739, %v1168
        %vm1233 = vcmp.eq.s32.totalorder %v739, %v1171
        %vm1234 = vcmp.eq.s32.totalorder %v739, %v1174
        %vm1235 = vcmp.eq.s32.totalorder %v739, %v1177
        %vm1236 = vcmp.eq.s32.totalorder %v739, %v1180
        %vm1237 = vcmp.eq.s32.totalorder %v739, %v1183
        %vm1238 = vcmp.eq.s32.totalorder %v739, %v1186
        %vm1239 = vcmp.eq.s32.totalorder %v739, %v1189
        %vm1240 = vcmp.eq.s32.totalorder %v739, %v1192
        %vm1241 = vcmp.eq.s32.totalorder %v739, %v1195
        %vm1242 = vcmp.eq.s32.totalorder %v739, %v1198
        %vm1243 = vcmp.eq.s32.totalorder %v739, %v1201
        %vm1244 = vcmp.eq.s32.totalorder %v739, %v1204
        %vm1245 = vcmp.eq.s32.totalorder %v739, %v1207
        %vm1246 = vcmp.eq.s32.totalorder %v739, %v1210
        %vm1247 = vcmp.eq.s32.totalorder %v739, %v1213
        %vm1248 = vcmp.eq.s32.totalorder %v739, %v1216
        %vm1249 = vcmp.eq.s32.totalorder %v739, %v1219
        %vm1250 = vcmp.eq.s32.totalorder %v739, %v1222
        %v1251 = vsel %vm1223, 1, 0
        %v1252 = vsel %vm1224, 1, 0
        %v1253 = vsel %vm1225, 1, 0
        %v1254 = vsel %vm1226, 1, 0
        %v1255 = vsel %vm1227, 1, 0
        %v1256 = vsel %vm1228, 1, 0
        %v1257 = vsel %vm1229, 1, 0
        %v1258 = vsel %vm1230, 1, 0
        %v1259 = vsel %vm1231, 1, 0
        %v1260 = vsel %vm1232, 1, 0
        %v1261 = vsel %vm1233, 1, 0
        %v1262 = vsel %vm1234, 1, 0
        %v1263 = vsel %vm1235, 1, 0
        %v1264 = vsel %vm1236, 1, 0
        %v1265 = vsel %vm1237, 1, 0
        %v1266 = vsel %vm1238, 1, 0
        %v1267 = vsel %vm1239, 1, 0
        %v1268 = vsel %vm1240, 1, 0
        %v1269 = vsel %vm1241, 1, 0
        %v1270 = vsel %vm1242, 1, 0
        %v1271 = vsel %vm1243, 1, 0
        %v1272 = vsel %vm1244, 1, 0
        %v1273 = vsel %vm1245, 1, 0
        %v1274 = vsel %vm1246, 1, 0
        %v1275 = vsel %vm1247, 1, 0
        %v1276 = vsel %vm1248, 1, 0
        %v1277 = vsel %vm1249, 1, 0
        %v1278 = vsel %vm1250, 1, 0
        %v1279 = vcvt.s32.f32 %v1251
        %v1280 = vcvt.s32.f32 %v1252
        %v1281 = vcvt.s32.f32 %v1253
        %v1282 = vcvt.s32.f32 %v1254
        %v1283 = vcvt.s32.f32 %v1255
        %v1284 = vcvt.s32.f32 %v1256
        %v1285 = vcvt.s32.f32 %v1257
        %v1286 = vcvt.s32.f32 %v1258
        %v1287 = vcvt.s32.f32 %v1259
        %v1288 = vcvt.s32.f32 %v1260
        %v1289 = vcvt.s32.f32 %v1261
        %v1290 = vcvt.s32.f32 %v1262
        %v1291 = vcvt.s32.f32 %v1263
        %v1292 = vcvt.s32.f32 %v1264
        %v1293 = vcvt.s32.f32 %v1265
        %v1294 = vcvt.s32.f32 %v1266
        %v1295 = vcvt.s32.f32 %v1267
        %v1296 = vcvt.s32.f32 %v1268
        %v1297 = vcvt.s32.f32 %v1269
        %v1298 = vcvt.s32.f32 %v1270
        %v1299 = vcvt.s32.f32 %v1271
        %v1300 = vcvt.s32.f32 %v1272
        %v1301 = vcvt.s32.f32 %v1273
        %v1302 = vcvt.s32.f32 %v1274
        %v1303 = vcvt.s32.f32 %v1275
        %v1304 = vcvt.s32.f32 %v1276
        %v1305 = vcvt.s32.f32 %v1277
        %v1306 = vcvt.s32.f32 %v1278
        %1307 = vset.pattern.permute.xlu0 0
        %1308 = vperm.xlu0 %1307, %v1135
        %v1309 = vpop.permute.xlu0 %1308
        %1310 = vset.pattern.permute.xlu0 0
        %1311 = vperm.xlu0 %1310, %v1136
        %v1312 = vpop.permute.xlu0 %1311
        %1313 = vset.pattern.permute.xlu0 0
        %1314 = vperm.xlu0 %1313, %v1137
        %v1315 = vpop.permute.xlu0 %1314
        %1316 = vset.pattern.permute.xlu0 0
        %1317 = vperm.xlu0 %1316, %v1138
        %v1318 = vpop.permute.xlu0 %1317
        %vm1319 = vcmp.eq.s32.totalorder %v739, %v1309
        %vm1320 = vcmp.eq.s32.totalorder %v739, %v1312
        %vm1321 = vcmp.eq.s32.totalorder %v739, %v1315
        %vm1322 = vcmp.eq.s32.totalorder %v739, %v1318
        %v1323 = vsel %vm1319, 1, 0
        %v1324 = vsel %vm1320, 1, 0
        %v1325 = vsel %vm1321, 1, 0
        %v1326 = vsel %vm1322, 1, 0
        %v1327 = vcvt.s32.f32 %v1323
        %v1328 = vcvt.s32.f32 %v1324
        %v1329 = vcvt.s32.f32 %v1325
        %v1330 = vcvt.s32.f32 %v1326
        %v1331 = vsub.f32 %v1279, %v1327
        %v1332 = vsub.f32 %v1280, %v1328
        %v1333 = vsub.f32 %v1281, %v1329
        %v1334 = vsub.f32 %v1282, %v1330
        %v1335 = vsub.f32 %v1283, %v1327
        %v1336 = vsub.f32 %v1284, %v1328
        %v1337 = vsub.f32 %v1285, %v1329
        %v1338 = vsub.f32 %v1286, %v1330
        %v1339 = vsub.f32 %v1287, %v1327
        %v1340 = vsub.f32 %v1288, %v1328
        %v1341 = vsub.f32 %v1289, %v1329
        %v1342 = vsub.f32 %v1290, %v1330
        %v1343 = vsub.f32 %v1291, %v1327
        %v1344 = vsub.f32 %v1292, %v1328
        %v1345 = vsub.f32 %v1293, %v1329
        %v1346 = vsub.f32 %v1294, %v1330
        %v1347 = vsub.f32 %v1295, %v1327
        %v1348 = vsub.f32 %v1296, %v1328
        %v1349 = vsub.f32 %v1297, %v1329
        %v1350 = vsub.f32 %v1298, %v1330
        %v1351 = vsub.f32 %v1299, %v1327
        %v1352 = vsub.f32 %v1300, %v1328
        %v1353 = vsub.f32 %v1301, %v1329
        %v1354 = vsub.f32 %v1302, %v1330
        %v1355 = vsub.f32 %v1303, %v1327
        %v1356 = vsub.f32 %v1304, %v1328
        %v1357 = vsub.f32 %v1305, %v1329
        %v1358 = vsub.f32 %v1306, %v1330
        %v1359 = vpack.c.bf16 %v1332, %v1331
        %v1360 = vpack.c.bf16 %v1334, %v1333
        %v1361 = vpack.c.bf16 %v1336, %v1335
        %v1362 = vpack.c.bf16 %v1338, %v1337
        %v1363 = vpack.c.bf16 %v1340, %v1339
        %v1364 = vpack.c.bf16 %v1342, %v1341
        %v1365 = vpack.c.bf16 %v1344, %v1343
        %v1366 = vpack.c.bf16 %v1346, %v1345
        %v1367 = vpack.c.bf16 %v1348, %v1347
        %v1368 = vpack.c.bf16 %v1350, %v1349
        %v1369 = vpack.c.bf16 %v1352, %v1351
        %v1370 = vpack.c.bf16 %v1354, %v1353
        %v1371 = vpack.c.bf16 %v1356, %v1355
        %v1372 = vpack.c.bf16 %v1358, %v1357
        %vm1373 = vcmask 261120
        %v1375 = vsel %vm1373, %v1359, 0
        %v1378 = vsel %vm1373, %v1360, 0
        %v1381 = vsel %vm1373, %v1361, 0
        %v1384 = vsel %vm1373, %v1362, 0
        %v1387 = vsel %vm1373, %v1363, 0
        %v1390 = vsel %vm1373, %v1364, 0
        %v1393 = vsel %vm1373, %v1365, 0
        %v1396 = vsel %vm1373, %v1366, 0
        %v1399 = vsel %vm1373, %v1367, 0
        %v1402 = vsel %vm1373, %v1368, 0
        %v1405 = vsel %vm1373, %v1369, 0
        %v1408 = vsel %vm1373, %v1370, 0
        %v1411 = vsel %vm1373, %v1371, 0
        %v1414 = vsel %vm1373, %v1372, 0
        %1416 = vmatpush.bf16.msra.mxu0 0
        %1417 = vmatpush.bf16.msra.mxu0 0
        %1418 = vmatpush.bf16.msra.mxu0 0
        %1419 = vmatpush.bf16.msra.mxu0 0
        %1420 = vmatpush.bf16.msra.mxu0 0
        %1421 = vmatpush.bf16.msra.mxu0 0
        %1422 = vmatpush.bf16.msra.mxu0 %v1133
        %1423 = vmatpush.bf16.msra.mxu0 %v1132
        %1424 = vmatmul.bf16.gmra.mxu0 %v1375
        %v1425 = vpop.f32.mrf.mxu0
        %v1426 = vadd.f32 0.0, %v1425
        %v1427 = vpop.f32.mrf.mxu0
        %v1428 = vadd.f32 0.0, %v1427
        %1429 = vmatmul.bf16.gmra.mxu0 %v1378
        %v1430 = vpop.f32.mrf.mxu0
        %v1431 = vadd.f32 0.0, %v1430
        %v1432 = vpop.f32.mrf.mxu0
        %v1433 = vadd.f32 0.0, %v1432
        %1434 = vmatmul.bf16.gmra.mxu0 %v1381
        %v1435 = vpop.f32.mrf.mxu0
        %v1436 = vadd.f32 0.0, %v1435
        %v1437 = vpop.f32.mrf.mxu0
        %v1438 = vadd.f32 0.0, %v1437
        %1439 = vmatmul.bf16.gmra.mxu0 %v1384
        %v1440 = vpop.f32.mrf.mxu0
        %v1441 = vadd.f32 0.0, %v1440
        %v1442 = vpop.f32.mrf.mxu0
        %v1443 = vadd.f32 0.0, %v1442
        %1444 = vmatmul.bf16.gmra.mxu0 %v1387
        %v1445 = vpop.f32.mrf.mxu0
        %v1446 = vadd.f32 0.0, %v1445
        %v1447 = vpop.f32.mrf.mxu0
        %v1448 = vadd.f32 0.0, %v1447
        %1449 = vmatmul.bf16.gmra.mxu0 %v1390
        %v1450 = vpop.f32.mrf.mxu0
        %v1451 = vadd.f32 0.0, %v1450
        %v1452 = vpop.f32.mrf.mxu0
        %v1453 = vadd.f32 0.0, %v1452
        %1454 = vmatmul.bf16.gmra.mxu0 %v1393
        %v1455 = vpop.f32.mrf.mxu0
        %v1456 = vadd.f32 0.0, %v1455
        %v1457 = vpop.f32.mrf.mxu0
        %v1458 = vadd.f32 0.0, %v1457
        %1459 = vmatmul.bf16.gmra.mxu0 %v1396
        %v1460 = vpop.f32.mrf.mxu0
        %v1461 = vadd.f32 0.0, %v1460
        %v1462 = vpop.f32.mrf.mxu0
        %v1463 = vadd.f32 0.0, %v1462
        %1464 = vmatmul.bf16.gmra.mxu0 %v1399
        %v1465 = vpop.f32.mrf.mxu0
        %v1466 = vadd.f32 0.0, %v1465
        %v1467 = vpop.f32.mrf.mxu0
        %v1468 = vadd.f32 0.0, %v1467
        %1469 = vmatmul.bf16.gmra.mxu0 %v1402
        %v1470 = vpop.f32.mrf.mxu0
        %v1471 = vadd.f32 0.0, %v1470
        %v1472 = vpop.f32.mrf.mxu0
        %v1473 = vadd.f32 0.0, %v1472
        %1474 = vmatmul.bf16.gmra.mxu0 %v1405
        %v1475 = vpop.f32.mrf.mxu0
        %v1476 = vadd.f32 0.0, %v1475
        %v1477 = vpop.f32.mrf.mxu0
        %v1478 = vadd.f32 0.0, %v1477
        %1479 = vmatmul.bf16.gmra.mxu0 %v1408
        %v1480 = vpop.f32.mrf.mxu0
        %v1481 = vadd.f32 0.0, %v1480
        %v1482 = vpop.f32.mrf.mxu0
        %v1483 = vadd.f32 0.0, %v1482
        %1484 = vmatmul.bf16.gmra.mxu0 %v1411
        %v1485 = vpop.f32.mrf.mxu0
        %v1486 = vadd.f32 0.0, %v1485
        %v1487 = vpop.f32.mrf.mxu0
        %v1488 = vadd.f32 0.0, %v1487
        %1489 = vmatmul.bf16.gmra.mxu0 %v1414
        %v1490 = vpop.f32.mrf.mxu0
        %v1491 = vadd.f32 0.0, %v1490
        %v1492 = vpop.f32.mrf.mxu0
        %v1493 = vadd.f32 0.0, %v1492
        %1494 = vdwg.mxu0
        %v1495 = vld [vmem:[%s6] sm:$0x3]
        %vm1496 = vcmask 31744
        %v1498 = vsel %vm1496, %v1132, 0
        %v1501 = vsel %vm1496, %v1133, 0
        %vm1503 = vcmask 1041408
        %v1505 = vsel %vm1503, %v1495, 0
        %1507 = vmatpush.bf16.msra.mxu0 0
        %1508 = vmatpush.bf16.msra.mxu0 0
        %1509 = vmatpush.bf16.msra.mxu0 0
        %1510 = vmatpush.bf16.msra.mxu0 0
        %1511 = vmatpush.bf16.msra.mxu0 0
        %1512 = vmatpush.bf16.msra.mxu0 0
        %1513 = vmatpush.bf16.msra.mxu0 0
        %1514 = vmatpush.bf16.msra.mxu0 %v1505
        %1515 = vmatmul.bf16.gmra.mxu0 %v1498
        %v1516 = vpop.f32.mrf.mxu0
        %v1517 = vadd.f32 0.0, %v1516
        %v1518 = vpop.f32.mrf.mxu0
        %v1519 = vadd.f32 0.0, %v1518
        %1520 = vmatmul.bf16.gmra.mxu0 %v1501
        %v1521 = vpop.f32.mrf.mxu0
        %v1522 = vadd.f32 0.0, %v1521
        %v1523 = vpop.f32.mrf.mxu0
        %v1524 = vadd.f32 0.0, %v1523
        %1525 = vdwg.mxu0
        %v1526 = vpack.c.bf16 %v1428, %v1426
        %v1527 = vpack.c.bf16 %v1433, %v1431
        %v1528 = vpack.c.bf16 %v1438, %v1436
        %v1529 = vpack.c.bf16 %v1443, %v1441
        %v1530 = vpack.c.bf16 %v1448, %v1446
        %v1531 = vpack.c.bf16 %v1453, %v1451
        %v1532 = vpack.c.bf16 %v1458, %v1456
        %v1533 = vpack.c.bf16 %v1463, %v1461
        %v1534 = vpack.c.bf16 %v1468, %v1466
        %v1535 = vpack.c.bf16 %v1473, %v1471
        %v1536 = vpack.c.bf16 %v1478, %v1476
        %v1537 = vpack.c.bf16 %v1483, %v1481
        %v1538 = vpack.c.bf16 %v1488, %v1486
        %v1539 = vpack.c.bf16 %v1493, %v1491
        %v1540 = vld [vmem:[%s7] sm:$0x3]
        %v1542 = vsel %vm1496, %v1526, 0
        %v1545 = vsel %vm1496, %v1527, 0
        %v1548 = vsel %vm1496, %v1528, 0
        %v1551 = vsel %vm1496, %v1529, 0
        %v1554 = vsel %vm1496, %v1530, 0
        %v1557 = vsel %vm1496, %v1531, 0
        %v1560 = vsel %vm1496, %v1532, 0
        %v1563 = vsel %vm1496, %v1533, 0
        %v1566 = vsel %vm1496, %v1534, 0
        %v1569 = vsel %vm1496, %v1535, 0
        %v1572 = vsel %vm1496, %v1536, 0
        %v1575 = vsel %vm1496, %v1537, 0
        %v1578 = vsel %vm1496, %v1538, 0
        %v1581 = vsel %vm1496, %v1539, 0
        %v1584 = vsel %vm1503, %v1540, 0
        %1586 = vmatpush.bf16.msra.mxu0 0
        %1587 = vmatpush.bf16.msra.mxu0 0
        %1588 = vmatpush.bf16.msra.mxu0 0
        %1589 = vmatpush.bf16.msra.mxu0 0
        %1590 = vmatpush.bf16.msra.mxu0 0
        %1591 = vmatpush.bf16.msra.mxu0 0
        %1592 = vmatpush.bf16.msra.mxu0 0
        %1593 = vmatpush.bf16.msra.mxu0 %v1584
        %1594 = vmatmul.bf16.gmra.mxu0 %v1542
        %v1595 = vpop.f32.mrf.mxu0
        %v1596 = vadd.f32 %v1517, %v1595
        %v1597 = vpop.f32.mrf.mxu0
        %v1598 = vadd.f32 %v1519, %v1597
        %1599 = vmatmul.bf16.gmra.mxu0 %v1545
        %v1600 = vpop.f32.mrf.mxu0
        %v1601 = vadd.f32 %v1522, %v1600
        %v1602 = vpop.f32.mrf.mxu0
        %v1603 = vadd.f32 %v1524, %v1602
        %1604 = vmatmul.bf16.gmra.mxu0 %v1548
        %v1605 = vpop.f32.mrf.mxu0
        %v1606 = vadd.f32 %v1517, %v1605
        %v1607 = vpop.f32.mrf.mxu0
        %v1608 = vadd.f32 %v1519, %v1607
        %1609 = vmatmul.bf16.gmra.mxu0 %v1551
        %v1610 = vpop.f32.mrf.mxu0
        %v1611 = vadd.f32 %v1522, %v1610
        %v1612 = vpop.f32.mrf.mxu0
        %v1613 = vadd.f32 %v1524, %v1612
        %1614 = vmatmul.bf16.gmra.mxu0 %v1554
        %v1615 = vpop.f32.mrf.mxu0
        %v1616 = vadd.f32 %v1517, %v1615
        %v1617 = vpop.f32.mrf.mxu0
        %v1618 = vadd.f32 %v1519, %v1617
        %1619 = vmatmul.bf16.gmra.mxu0 %v1557
        %v1620 = vpop.f32.mrf.mxu0
        %v1621 = vadd.f32 %v1522, %v1620
        %v1622 = vpop.f32.mrf.mxu0
        %v1623 = vadd.f32 %v1524, %v1622
        %1624 = vmatmul.bf16.gmra.mxu0 %v1560
        %v1625 = vpop.f32.mrf.mxu0
        %v1626 = vadd.f32 %v1517, %v1625
        %v1627 = vpop.f32.mrf.mxu0
        %v1628 = vadd.f32 %v1519, %v1627
        %1629 = vmatmul.bf16.gmra.mxu0 %v1563
        %v1630 = vpop.f32.mrf.mxu0
        %v1631 = vadd.f32 %v1522, %v1630
        %v1632 = vpop.f32.mrf.mxu0
        %v1633 = vadd.f32 %v1524, %v1632
        %1634 = vmatmul.bf16.gmra.mxu0 %v1566
        %v1635 = vpop.f32.mrf.mxu0
        %v1636 = vadd.f32 %v1517, %v1635
        %v1637 = vpop.f32.mrf.mxu0
        %v1638 = vadd.f32 %v1519, %v1637
        %1639 = vmatmul.bf16.gmra.mxu0 %v1569
        %v1640 = vpop.f32.mrf.mxu0
        %v1641 = vadd.f32 %v1522, %v1640
        %v1642 = vpop.f32.mrf.mxu0
        %v1643 = vadd.f32 %v1524, %v1642
        %1644 = vmatmul.bf16.gmra.mxu0 %v1572
        %v1645 = vpop.f32.mrf.mxu0
        %v1646 = vadd.f32 %v1517, %v1645
        %v1647 = vpop.f32.mrf.mxu0
        %v1648 = vadd.f32 %v1519, %v1647
        %1649 = vmatmul.bf16.gmra.mxu0 %v1575
        %v1650 = vpop.f32.mrf.mxu0
        %v1651 = vadd.f32 %v1522, %v1650
        %v1652 = vpop.f32.mrf.mxu0
        %v1653 = vadd.f32 %v1524, %v1652
        %1654 = vmatmul.bf16.gmra.mxu0 %v1578
        %v1655 = vpop.f32.mrf.mxu0
        %v1656 = vadd.f32 %v1517, %v1655
        %v1657 = vpop.f32.mrf.mxu0
        %v1658 = vadd.f32 %v1519, %v1657
        %1659 = vmatmul.bf16.gmra.mxu0 %v1581
        %v1660 = vpop.f32.mrf.mxu0
        %v1661 = vadd.f32 %v1522, %v1660
        %v1662 = vpop.f32.mrf.mxu0
        %v1663 = vadd.f32 %v1524, %v1662
        %1664 = vdwg.mxu0
        %v1665 = vld [vmem:[%s8] sm:$0x1]
        %v1667 = vperm.slane %v1665, 0
        %v1669 = vadd.f32 %v1596, %v1667
        %v1670 = vadd.f32 %v1598, %v1667
        %v1671 = vadd.f32 %v1601, %v1667
        %v1672 = vadd.f32 %v1603, %v1667
        %v1673 = vadd.f32 %v1606, %v1667
        %v1674 = vadd.f32 %v1608, %v1667
        %v1675 = vadd.f32 %v1611, %v1667
        %v1676 = vadd.f32 %v1613, %v1667
        %v1677 = vadd.f32 %v1616, %v1667
        %v1678 = vadd.f32 %v1618, %v1667
        %v1679 = vadd.f32 %v1621, %v1667
        %v1680 = vadd.f32 %v1623, %v1667
        %v1681 = vadd.f32 %v1626, %v1667
        %v1682 = vadd.f32 %v1628, %v1667
        %v1683 = vadd.f32 %v1631, %v1667
        %v1684 = vadd.f32 %v1633, %v1667
        %v1685 = vadd.f32 %v1636, %v1667
        %v1686 = vadd.f32 %v1638, %v1667
        %v1687 = vadd.f32 %v1641, %v1667
        %v1688 = vadd.f32 %v1643, %v1667
        %v1689 = vadd.f32 %v1646, %v1667
        %v1690 = vadd.f32 %v1648, %v1667
        %v1691 = vadd.f32 %v1651, %v1667
        %v1692 = vadd.f32 %v1653, %v1667
        %v1693 = vadd.f32 %v1656, %v1667
        %v1694 = vadd.f32 %v1658, %v1667
        %v1695 = vadd.f32 %v1661, %v1667
        %v1696 = vadd.f32 %v1663, %v1667
        %v1697 = vmax.f32 %v1669, 0.0
        %v1698 = vmax.f32 %v1670, 0.0
        %v1699 = vmax.f32 %v1671, 0.0
        %v1700 = vmax.f32 %v1672, 0.0
        %v1701 = vmax.f32 %v1673, 0.0
        %v1702 = vmax.f32 %v1674, 0.0
        %v1703 = vmax.f32 %v1675, 0.0
        %v1704 = vmax.f32 %v1676, 0.0
        %v1705 = vmax.f32 %v1677, 0.0
        %v1706 = vmax.f32 %v1678, 0.0
        %v1707 = vmax.f32 %v1679, 0.0
        %v1708 = vmax.f32 %v1680, 0.0
        %v1709 = vmax.f32 %v1681, 0.0
        %v1710 = vmax.f32 %v1682, 0.0
        %v1711 = vmax.f32 %v1683, 0.0
        %v1712 = vmax.f32 %v1684, 0.0
        %v1713 = vmax.f32 %v1685, 0.0
        %v1714 = vmax.f32 %v1686, 0.0
        %v1715 = vmax.f32 %v1687, 0.0
        %v1716 = vmax.f32 %v1688, 0.0
        %v1717 = vmax.f32 %v1689, 0.0
        %v1718 = vmax.f32 %v1690, 0.0
        %v1719 = vmax.f32 %v1691, 0.0
        %v1720 = vmax.f32 %v1692, 0.0
        %v1721 = vmax.f32 %v1693, 0.0
        %v1722 = vmax.f32 %v1694, 0.0
        %v1723 = vmax.f32 %v1695, 0.0
        %v1724 = vmax.f32 %v1696, 0.0
        %v1725 = vpack.c.bf16 %v1698, %v1697
        %v1726 = vpack.c.bf16 %v1700, %v1699
        %v1727 = vpack.c.bf16 %v1702, %v1701
        %v1728 = vpack.c.bf16 %v1704, %v1703
        %v1729 = vpack.c.bf16 %v1706, %v1705
        %v1730 = vpack.c.bf16 %v1708, %v1707
        %v1731 = vpack.c.bf16 %v1710, %v1709
        %v1732 = vpack.c.bf16 %v1712, %v1711
        %v1733 = vpack.c.bf16 %v1714, %v1713
        %v1734 = vpack.c.bf16 %v1716, %v1715
        %v1735 = vpack.c.bf16 %v1718, %v1717
        %v1736 = vpack.c.bf16 %v1720, %v1719
        %v1737 = vpack.c.bf16 %v1722, %v1721
        %v1738 = vpack.c.bf16 %v1724, %v1723
        %v1739 = vld [vmem:[%s9] sm:$0xf]
        %v1740 = vld [vmem:[%s9 + $0x4] sm:$0xf]
        %v1741 = vld [vmem:[%s9 + $0x8] sm:$0xf]
        %v1742 = vld [vmem:[%s9 + $0xc] sm:$0xf]
        %v1743 = vld [vmem:[%s9 + $0x10] sm:$0xf]
        %v1744 = vld [vmem:[%s9 + $0x14] sm:$0xf]
        %v1745 = vld [vmem:[%s9 + $0x18] sm:$0xf]
        %v1746 = vld [vmem:[%s9 + $0x1c] sm:$0xf]
        %v1747 = vld [vmem:[%s9 + $0x20] sm:$0xf]
        %v1748 = vld [vmem:[%s9 + $0x24] sm:$0xf]
        %v1749 = vld [vmem:[%s9 + $0x28] sm:$0xf]
        %v1750 = vld [vmem:[%s9 + $0x2c] sm:$0xf]
        %v1751 = vld [vmem:[%s9 + $0x30] sm:$0xf]
        %v1752 = vld [vmem:[%s9 + $0x34] sm:$0xf]
        %v1753 = vld [vmem:[%s9 + $0x38] sm:$0xf]
        %v1754 = vld [vmem:[%s9 + $0x3c] sm:$0xf]
        %v1755 = vld [vmem:[%s10] sm:$0x1]
        %v1757 = vperm.slane %v1755, 0
        %v1775 = vunpack.c.l.b16 %v1739
        %v1776 = vunpack.c.l.b16 %v1740
        %v1777 = vunpack.c.l.b16 %v1741
        %v1778 = vunpack.c.l.b16 %v1742
        %v1779 = vunpack.c.l.b16 %v1743
        %v1780 = vunpack.c.l.b16 %v1744
        %v1781 = vunpack.c.l.b16 %v1745
        %v1782 = vunpack.c.l.b16 %v1746
        %v1783 = vunpack.c.l.b16 %v1747
        %v1784 = vunpack.c.l.b16 %v1748
        %v1785 = vunpack.c.l.b16 %v1749
        %v1786 = vunpack.c.l.b16 %v1750
        %v1787 = vunpack.c.l.b16 %v1751
        %v1788 = vunpack.c.l.b16 %v1752
        %v1789 = vunpack.c.l.b16 %v1753
        %v1790 = vunpack.c.l.b16 %v1754
        %v1791 = vpack.c.b16 %v1776, %v1775
        %v1792 = vpack.c.b16 %v1778, %v1777
        %v1793 = vpack.c.b16 %v1780, %v1779
        %v1794 = vpack.c.b16 %v1782, %v1781
        %v1795 = vpack.c.b16 %v1784, %v1783
        %v1796 = vpack.c.b16 %v1786, %v1785
        %v1797 = vpack.c.b16 %v1788, %v1787
        %v1798 = vpack.c.b16 %v1790, %v1789
        %1807 = vmatpush.bf16.msra.mxu0 %v1798
        %1808 = vmatpush.bf16.msra.mxu0 %v1797
        %1809 = vmatpush.bf16.msra.mxu0 %v1796
        %1810 = vmatpush.bf16.msra.mxu0 %v1795
        %1811 = vmatpush.bf16.msra.mxu0 %v1794
        %1812 = vmatpush.bf16.msra.mxu0 %v1793
        %1813 = vmatpush.bf16.msra.mxu0 %v1792
        %1814 = vmatpush.bf16.msra.mxu0 %v1791
        %1815 = vmatmul.bf16.gmra.mxu0 %v1725
        %v1816 = vpop.f32.mrf.mxu0
        %v1817 = vadd.f32 %v1757, %v1816
        %v1818 = vpop.f32.mrf.mxu0
        %v1819 = vadd.f32 %v1757, %v1818
        %1820 = vmatmul.bf16.gmra.mxu0 %v1726
        %v1821 = vpop.f32.mrf.mxu0
        %v1822 = vadd.f32 %v1757, %v1821
        %v1823 = vpop.f32.mrf.mxu0
        %v1824 = vadd.f32 %v1757, %v1823
        %1825 = vmatmul.bf16.gmra.mxu0 %v1727
        %v1826 = vpop.f32.mrf.mxu0
        %v1827 = vadd.f32 %v1757, %v1826
        %v1828 = vpop.f32.mrf.mxu0
        %v1829 = vadd.f32 %v1757, %v1828
        %1830 = vmatmul.bf16.gmra.mxu0 %v1728
        %v1831 = vpop.f32.mrf.mxu0
        %v1832 = vadd.f32 %v1757, %v1831
        %v1833 = vpop.f32.mrf.mxu0
        %v1834 = vadd.f32 %v1757, %v1833
        %1835 = vmatmul.bf16.gmra.mxu0 %v1729
        %v1836 = vpop.f32.mrf.mxu0
        %v1837 = vadd.f32 %v1757, %v1836
        %v1838 = vpop.f32.mrf.mxu0
        %v1839 = vadd.f32 %v1757, %v1838
        %1840 = vmatmul.bf16.gmra.mxu0 %v1730
        %v1841 = vpop.f32.mrf.mxu0
        %v1842 = vadd.f32 %v1757, %v1841
        %v1843 = vpop.f32.mrf.mxu0
        %v1844 = vadd.f32 %v1757, %v1843
        %1845 = vmatmul.bf16.gmra.mxu0 %v1731
        %v1846 = vpop.f32.mrf.mxu0
        %v1847 = vadd.f32 %v1757, %v1846
        %v1848 = vpop.f32.mrf.mxu0
        %v1849 = vadd.f32 %v1757, %v1848
        %1850 = vmatmul.bf16.gmra.mxu0 %v1732
        %v1851 = vpop.f32.mrf.mxu0
        %v1852 = vadd.f32 %v1757, %v1851
        %v1853 = vpop.f32.mrf.mxu0
        %v1854 = vadd.f32 %v1757, %v1853
        %1855 = vmatmul.bf16.gmra.mxu0 %v1733
        %v1856 = vpop.f32.mrf.mxu0
        %v1857 = vadd.f32 %v1757, %v1856
        %v1858 = vpop.f32.mrf.mxu0
        %v1859 = vadd.f32 %v1757, %v1858
        %1860 = vmatmul.bf16.gmra.mxu0 %v1734
        %v1861 = vpop.f32.mrf.mxu0
        %v1862 = vadd.f32 %v1757, %v1861
        %v1863 = vpop.f32.mrf.mxu0
        %v1864 = vadd.f32 %v1757, %v1863
        %1865 = vmatmul.bf16.gmra.mxu0 %v1735
        %v1866 = vpop.f32.mrf.mxu0
        %v1867 = vadd.f32 %v1757, %v1866
        %v1868 = vpop.f32.mrf.mxu0
        %v1869 = vadd.f32 %v1757, %v1868
        %1870 = vmatmul.bf16.gmra.mxu0 %v1736
        %v1871 = vpop.f32.mrf.mxu0
        %v1872 = vadd.f32 %v1757, %v1871
        %v1873 = vpop.f32.mrf.mxu0
        %v1874 = vadd.f32 %v1757, %v1873
        %1875 = vmatmul.bf16.gmra.mxu0 %v1737
        %v1876 = vpop.f32.mrf.mxu0
        %v1877 = vadd.f32 %v1757, %v1876
        %v1878 = vpop.f32.mrf.mxu0
        %v1879 = vadd.f32 %v1757, %v1878
        %1880 = vmatmul.bf16.gmra.mxu0 %v1738
        %v1881 = vpop.f32.mrf.mxu0
        %v1882 = vadd.f32 %v1757, %v1881
        %v1883 = vpop.f32.mrf.mxu0
        %v1884 = vadd.f32 %v1757, %v1883
        %1885 = vdwg.mxu0
        %v1886 = vmax.f32 %v1817, 0.0
        %v1887 = vmax.f32 %v1819, 0.0
        %v1888 = vmax.f32 %v1822, 0.0
        %v1889 = vmax.f32 %v1824, 0.0
        %v1890 = vmax.f32 %v1827, 0.0
        %v1891 = vmax.f32 %v1829, 0.0
        %v1892 = vmax.f32 %v1832, 0.0
        %v1893 = vmax.f32 %v1834, 0.0
        %v1894 = vmax.f32 %v1837, 0.0
        %v1895 = vmax.f32 %v1839, 0.0
        %v1896 = vmax.f32 %v1842, 0.0
        %v1897 = vmax.f32 %v1844, 0.0
        %v1898 = vmax.f32 %v1847, 0.0
        %v1899 = vmax.f32 %v1849, 0.0
        %v1900 = vmax.f32 %v1852, 0.0
        %v1901 = vmax.f32 %v1854, 0.0
        %v1902 = vmax.f32 %v1857, 0.0
        %v1903 = vmax.f32 %v1859, 0.0
        %v1904 = vmax.f32 %v1862, 0.0
        %v1905 = vmax.f32 %v1864, 0.0
        %v1906 = vmax.f32 %v1867, 0.0
        %v1907 = vmax.f32 %v1869, 0.0
        %v1908 = vmax.f32 %v1872, 0.0
        %v1909 = vmax.f32 %v1874, 0.0
        %v1910 = vmax.f32 %v1877, 0.0
        %v1911 = vmax.f32 %v1879, 0.0
        %v1912 = vmax.f32 %v1882, 0.0
        %v1913 = vmax.f32 %v1884, 0.0
        %v1914 = vpack.c.bf16 %v1887, %v1886
        %v1915 = vpack.c.bf16 %v1889, %v1888
        %v1916 = vpack.c.bf16 %v1891, %v1890
        %v1917 = vpack.c.bf16 %v1893, %v1892
        %v1918 = vpack.c.bf16 %v1895, %v1894
        %v1919 = vpack.c.bf16 %v1897, %v1896
        %v1920 = vpack.c.bf16 %v1899, %v1898
        %v1921 = vpack.c.bf16 %v1901, %v1900
        %v1922 = vpack.c.bf16 %v1903, %v1902
        %v1923 = vpack.c.bf16 %v1905, %v1904
        %v1924 = vpack.c.bf16 %v1907, %v1906
        %v1925 = vpack.c.bf16 %v1909, %v1908
        %v1926 = vpack.c.bf16 %v1911, %v1910
        %v1927 = vpack.c.bf16 %v1913, %v1912
        %v1928 = vld [vmem:[%s11] sm:$0xf]
        %v1929 = vld [vmem:[%s11 + $0x4] sm:$0xf]
        %v1930 = vld [vmem:[%s11 + $0x8] sm:$0xf]
        %v1931 = vld [vmem:[%s11 + $0xc] sm:$0xf]
        %v1932 = vld [vmem:[%s11 + $0x10] sm:$0xf]
        %v1933 = vld [vmem:[%s11 + $0x14] sm:$0xf]
        %v1934 = vld [vmem:[%s11 + $0x18] sm:$0xf]
        %v1935 = vld [vmem:[%s11 + $0x1c] sm:$0xf]
        %v1936 = vld [vmem:[%s11 + $0x20] sm:$0xf]
        %v1937 = vld [vmem:[%s11 + $0x24] sm:$0xf]
        %v1938 = vld [vmem:[%s11 + $0x28] sm:$0xf]
        %v1939 = vld [vmem:[%s11 + $0x2c] sm:$0xf]
        %v1940 = vld [vmem:[%s11 + $0x30] sm:$0xf]
        %v1941 = vld [vmem:[%s11 + $0x34] sm:$0xf]
        %v1942 = vld [vmem:[%s11 + $0x38] sm:$0xf]
        %v1943 = vld [vmem:[%s11 + $0x3c] sm:$0xf]
        %v1944 = vld [vmem:[%s12] sm:$0x1]
        %v1946 = vperm.slane %v1944, 0
        %v1964 = vunpack.c.l.b16 %v1928
        %v1965 = vunpack.c.l.b16 %v1929
        %v1966 = vunpack.c.l.b16 %v1930
        %v1967 = vunpack.c.l.b16 %v1931
        %v1968 = vunpack.c.l.b16 %v1932
        %v1969 = vunpack.c.l.b16 %v1933
        %v1970 = vunpack.c.l.b16 %v1934
        %v1971 = vunpack.c.l.b16 %v1935
        %v1972 = vunpack.c.l.b16 %v1936
        %v1973 = vunpack.c.l.b16 %v1937
        %v1974 = vunpack.c.l.b16 %v1938
        %v1975 = vunpack.c.l.b16 %v1939
        %v1976 = vunpack.c.l.b16 %v1940
        %v1977 = vunpack.c.l.b16 %v1941
        %v1978 = vunpack.c.l.b16 %v1942
        %v1979 = vunpack.c.l.b16 %v1943
        %v1980 = vpack.c.b16 %v1965, %v1964
        %v1981 = vpack.c.b16 %v1967, %v1966
        %v1982 = vpack.c.b16 %v1969, %v1968
        %v1983 = vpack.c.b16 %v1971, %v1970
        %v1984 = vpack.c.b16 %v1973, %v1972
        %v1985 = vpack.c.b16 %v1975, %v1974
        %v1986 = vpack.c.b16 %v1977, %v1976
        %v1987 = vpack.c.b16 %v1979, %v1978
        %1996 = vmatpush.bf16.msra.mxu0 %v1987
        %1997 = vmatpush.bf16.msra.mxu0 %v1986
        %1998 = vmatpush.bf16.msra.mxu0 %v1985
        %1999 = vmatpush.bf16.msra.mxu0 %v1984
        %2000 = vmatpush.bf16.msra.mxu0 %v1983
        %2001 = vmatpush.bf16.msra.mxu0 %v1982
        %2002 = vmatpush.bf16.msra.mxu0 %v1981
        %2003 = vmatpush.bf16.msra.mxu0 %v1980
        %2004 = vmatmul.bf16.gmra.mxu0 %v1914
        %v2005 = vpop.f32.mrf.mxu0
        %v2006 = vadd.f32 %v1946, %v2005
        %v2007 = vpop.f32.mrf.mxu0
        %v2008 = vadd.f32 %v1946, %v2007
        %2009 = vmatmul.bf16.gmra.mxu0 %v1915
        %v2010 = vpop.f32.mrf.mxu0
        %v2011 = vadd.f32 %v1946, %v2010
        %v2012 = vpop.f32.mrf.mxu0
        %v2013 = vadd.f32 %v1946, %v2012
        %2014 = vmatmul.bf16.gmra.mxu0 %v1916
        %v2015 = vpop.f32.mrf.mxu0
        %v2016 = vadd.f32 %v1946, %v2015
        %v2017 = vpop.f32.mrf.mxu0
        %v2018 = vadd.f32 %v1946, %v2017
        %2019 = vmatmul.bf16.gmra.mxu0 %v1917
        %v2020 = vpop.f32.mrf.mxu0
        %v2021 = vadd.f32 %v1946, %v2020
        %v2022 = vpop.f32.mrf.mxu0
        %v2023 = vadd.f32 %v1946, %v2022
        %2024 = vmatmul.bf16.gmra.mxu0 %v1918
        %v2025 = vpop.f32.mrf.mxu0
        %v2026 = vadd.f32 %v1946, %v2025
        %v2027 = vpop.f32.mrf.mxu0
        %v2028 = vadd.f32 %v1946, %v2027
        %2029 = vmatmul.bf16.gmra.mxu0 %v1919
        %v2030 = vpop.f32.mrf.mxu0
        %v2031 = vadd.f32 %v1946, %v2030
        %v2032 = vpop.f32.mrf.mxu0
        %v2033 = vadd.f32 %v1946, %v2032
        %2034 = vmatmul.bf16.gmra.mxu0 %v1920
        %v2035 = vpop.f32.mrf.mxu0
        %v2036 = vadd.f32 %v1946, %v2035
        %v2037 = vpop.f32.mrf.mxu0
        %v2038 = vadd.f32 %v1946, %v2037
        %2039 = vmatmul.bf16.gmra.mxu0 %v1921
        %v2040 = vpop.f32.mrf.mxu0
        %v2041 = vadd.f32 %v1946, %v2040
        %v2042 = vpop.f32.mrf.mxu0
        %v2043 = vadd.f32 %v1946, %v2042
        %2044 = vmatmul.bf16.gmra.mxu0 %v1922
        %v2045 = vpop.f32.mrf.mxu0
        %v2046 = vadd.f32 %v1946, %v2045
        %v2047 = vpop.f32.mrf.mxu0
        %v2048 = vadd.f32 %v1946, %v2047
        %2049 = vmatmul.bf16.gmra.mxu0 %v1923
        %v2050 = vpop.f32.mrf.mxu0
        %v2051 = vadd.f32 %v1946, %v2050
        %v2052 = vpop.f32.mrf.mxu0
        %v2053 = vadd.f32 %v1946, %v2052
        %2054 = vmatmul.bf16.gmra.mxu0 %v1924
        %v2055 = vpop.f32.mrf.mxu0
        %v2056 = vadd.f32 %v1946, %v2055
        %v2057 = vpop.f32.mrf.mxu0
        %v2058 = vadd.f32 %v1946, %v2057
        %2059 = vmatmul.bf16.gmra.mxu0 %v1925
        %v2060 = vpop.f32.mrf.mxu0
        %v2061 = vadd.f32 %v1946, %v2060
        %v2062 = vpop.f32.mrf.mxu0
        %v2063 = vadd.f32 %v1946, %v2062
        %2064 = vmatmul.bf16.gmra.mxu0 %v1926
        %v2065 = vpop.f32.mrf.mxu0
        %v2066 = vadd.f32 %v1946, %v2065
        %v2067 = vpop.f32.mrf.mxu0
        %v2068 = vadd.f32 %v1946, %v2067
        %2069 = vmatmul.bf16.gmra.mxu0 %v1927
        %v2070 = vpop.f32.mrf.mxu0
        %v2071 = vadd.f32 %v1946, %v2070
        %v2072 = vpop.f32.mrf.mxu0
        %v2073 = vadd.f32 %v1946, %v2072
        %2074 = vdwg.mxu0
        %v2075 = vmax.f32 %v2006, 0.0
        %v2076 = vmax.f32 %v2008, 0.0
        %v2077 = vmax.f32 %v2011, 0.0
        %v2078 = vmax.f32 %v2013, 0.0
        %v2079 = vmax.f32 %v2016, 0.0
        %v2080 = vmax.f32 %v2018, 0.0
        %v2081 = vmax.f32 %v2021, 0.0
        %v2082 = vmax.f32 %v2023, 0.0
        %v2083 = vmax.f32 %v2026, 0.0
        %v2084 = vmax.f32 %v2028, 0.0
        %v2085 = vmax.f32 %v2031, 0.0
        %v2086 = vmax.f32 %v2033, 0.0
        %v2087 = vmax.f32 %v2036, 0.0
        %v2088 = vmax.f32 %v2038, 0.0
        %v2089 = vmax.f32 %v2041, 0.0
        %v2090 = vmax.f32 %v2043, 0.0
        %v2091 = vmax.f32 %v2046, 0.0
        %v2092 = vmax.f32 %v2048, 0.0
        %v2093 = vmax.f32 %v2051, 0.0
        %v2094 = vmax.f32 %v2053, 0.0
        %v2095 = vmax.f32 %v2056, 0.0
        %v2096 = vmax.f32 %v2058, 0.0
        %v2097 = vmax.f32 %v2061, 0.0
        %v2098 = vmax.f32 %v2063, 0.0
        %v2099 = vmax.f32 %v2066, 0.0
        %v2100 = vmax.f32 %v2068, 0.0
        %v2101 = vmax.f32 %v2071, 0.0
        %v2102 = vmax.f32 %v2073, 0.0
        %v2103 = vadd.f32 %v2075, %v2079
        %v2104 = vadd.f32 %v2103, %v2083
        %v2105 = vadd.f32 %v2104, %v2087
        %v2106 = vadd.f32 %v2105, %v2091
        %v2107 = vadd.f32 %v2106, %v2095
        %v2108 = vadd.f32 %v2107, %v2099
        %v2109 = vadd.f32 %v2076, %v2080
        %v2110 = vadd.f32 %v2109, %v2084
        %v2111 = vadd.f32 %v2110, %v2088
        %v2112 = vadd.f32 %v2111, %v2092
        %v2113 = vadd.f32 %v2112, %v2096
        %v2114 = vadd.f32 %v2113, %v2100
        %v2115 = vadd.f32 %v2077, %v2081
        %v2116 = vadd.f32 %v2115, %v2085
        %v2117 = vadd.f32 %v2116, %v2089
        %v2118 = vadd.f32 %v2117, %v2093
        %v2119 = vadd.f32 %v2118, %v2097
        %v2120 = vadd.f32 %v2119, %v2101
        %v2121 = vadd.f32 %v2078, %v2082
        %v2122 = vadd.f32 %v2121, %v2086
        %v2123 = vadd.f32 %v2122, %v2090
        %v2124 = vadd.f32 %v2123, %v2094
        %v2125 = vadd.f32 %v2124, %v2098
        %v2126 = vadd.f32 %v2125, %v2102
        %v2127 = vrcp.pop 7.0
        %v2128 = vmul.f32 7.0, %v2127
        %v2129 = vsub.f32 1.0, %v2128
        %v2130 = vmul.f32 %v2127, %v2129
        %v2131 = vadd.f32 %v2127, %v2130
        %vm2132 = vweird.f32 %v2127
        %v2133 = vsel %vm2132, %v2127, %v2131
        %v2134 = vmul.f32 %v2108, %v2133
        %v2135 = vmul.f32 %v2114, %v2133
        %v2136 = vmul.f32 %v2120, %v2133
        %v2137 = vmul.f32 %v2126, %v2133
        %v2138 = vld [vmem:[%s13] sm:$0x3]
        %v2139 = vld [vmem:[%s14] sm:$0x1]
        %v2141 = vperm.slane %v2139, 0
        %v2144 = vsel %vm1503, %v2138, 0
        %2146 = vmatpush.bf16.msra.mxu0 0
        %2147 = vmatpush.bf16.msra.mxu0 0
        %2148 = vmatpush.bf16.msra.mxu0 0
        %2149 = vmatpush.bf16.msra.mxu0 0
        %2150 = vmatpush.bf16.msra.mxu0 0
        %2151 = vmatpush.bf16.msra.mxu0 0
        %2152 = vmatpush.bf16.msra.mxu0 0
        %2153 = vmatpush.bf16.msra.mxu0 %v2144
        %2154 = vmatmul.bf16.gmra.mxu0 %v1498
        %v2155 = vpop.f32.mrf.mxu0
        %v2156 = vadd.f32 %v2141, %v2155
        %v2157 = vpop.f32.mrf.mxu0
        %v2158 = vadd.f32 %v2141, %v2157
        %2159 = vmatmul.bf16.gmra.mxu0 %v1501
        %v2160 = vpop.f32.mrf.mxu0
        %v2161 = vadd.f32 %v2141, %v2160
        %v2162 = vpop.f32.mrf.mxu0
        %v2163 = vadd.f32 %v2141, %v2162
        %2164 = vdwg.mxu0
        %v2165 = vadd.f32 %v2156, %v2134
        %v2166 = vadd.f32 %v2158, %v2135
        %v2167 = vadd.f32 %v2161, %v2136
        %v2168 = vadd.f32 %v2163, %v2137
        %v2169 = vmax.f32 %v2165, 0.0
        %v2170 = vmax.f32 %v2166, 0.0
        %v2171 = vmax.f32 %v2167, 0.0
        %v2172 = vmax.f32 %v2168, 0.0
        %v2173 = vmul.f32 %v2169, %v602
        %v2174 = vmul.f32 %v2170, %v607
        %v2175 = vmul.f32 %v2171, %v612
        %v2176 = vmul.f32 %v2172, %v617
        %2177 = vst [vmem:[%s544] sm:$0xff] %v2173
        %2178 = vst [vmem:[%s544 + $0x8] sm:$0xff] %v2174
        %2179 = vst [vmem:[%s544 + $0x10] sm:$0xff] %v2175
        %2180 = vst [vmem:[%s544 + $0x18] sm:$0xff] %v2176
        %s2181 = sand.u32 %s372, 1
        %s2182 = scalar_lea.sflag [#allocation3], %s2181
        %s2183 = sand.u32 %s372, 1
        %s2184 = smul.addr %s2183, 32
        %s2185 = scalar_lea.vmem [#allocation2], %s2184
        // Predicated region
        $region81: #{tpu_custom_call.1} parent=79 // pred_check
          %p2186 = pneg %p382
        $region82: #{tpu_custom_call.1} parent=79 // pred_check_branch
          %2188 = sbr.rel (%p2186) target = $region84
        $region83: #{tpu_custom_call.1} parent=79 // pred_region
          %s2189 = smul.u32 2, %s29
          %2191 = vsyncadd %s2182, 0
          %s2192 = smul.addr %s2189, 2
          %s2193 = smul.addr %s2192, 8
          %s2194 = scalar_lea.hbm %s15, %s2193
          %s2195 = sshll.u32 %s2185, 4
          %s2196 = int_to_ptr.vmem [resolvable:$true] %s2195
          %s2197 = sshll.u32 %s2194, 4
          %s2198 = int_to_ptr.hbm [resolvable:$true] %s2197
          %2203 = dma.vmem_to_hbm [thread:$0]  %s2196, 512, %s2198, %s2182, 128, 128, 8
        $region84: #{tpu_custom_call.1} parent=79 // pred_fallthru
          _
      $region80: #{tpu_custom_call.1} parent=5 // pred_fallthru
        _
      %p2204 = scmp.le.s32.totalorder 2, %s24
      // Predicated region
      $region85: #{tpu_custom_call.1} parent=5 // pred_check
        %p2205 = pneg %p2204
      $region86: #{tpu_custom_call.1} parent=5 // pred_check_branch
        %2207 = sbr.rel (%p2205) target = $region88
      $region87: #{tpu_custom_call.1} parent=5 // pred_region
        %s2208 = ssub.s32 %s24, 2
        // Predicated region
        $region89: #{tpu_custom_call.1} parent=87 // pred_check
          %p2209 = pneg %p388
        $region90: #{tpu_custom_call.1} parent=87 // pred_check_branch
          %2211 = sbr.rel (%p2209) target = $region92
        $region91: #{tpu_custom_call.1} parent=87 // pred_region
          %s2212 = sand.u32 %s373, 1
          %s2213 = scalar_lea.sflag [#allocation3], %s2212
          %s2214 = sand.u32 %s373, 1
          %s2215 = smul.addr %s2214, 32
          %s2216 = scalar_lea.vmem [#allocation2], %s2215
          %2218 = dma.done %s2213, 512
        $region92: #{tpu_custom_call.1} parent=87 // pred_fallthru
          _
      $region88: #{tpu_custom_call.1} parent=5 // pred_fallthru
        _
    $region6: #{tpu_custom_call.1} parent=1 // loop_footer
      %s28 = sadd.s32 1, %s24
    $region7: #{tpu_custom_call.1} parent=1 // loop_footer_branch
      %23 = sbr.rel target = $region3
    $region8: #{tpu_custom_call.1} parent=1 // loop_exit
      _
    %2219 = vsyncpa [#allocation3], 1
    %s2220 = scalar_lea.sflag [#allocation3], 1
    %2221 = vsyncpa %s2220, 1

</llo_original>
